<compile_context>
chip_gen: v5e
topology: v5e:2x2
jax: 0.10.0
libtpu: 0.0.40
codegen_flags: <defaults>
</compile_context>

<pallas_src>
import jax
import jax.numpy as jnp
import numpy as np
from jax.experimental import pallas as pl
from jax.experimental.pallas import tpu as pltpu


def _make_conv_kernel(KH, KW, add_bias, apply_norm, apply_leaky,
                      negative_slope=0.2, eps=1e-5):
    """Fused stride-1 conv [+bias] [+instance-norm] [+leaky-relu], one batch elem.

    Refs (batch dim squeezed away by BlockSpec):
      x_ref: (H_in, W_in, C_in)      zero-padded input, bf16
      w_ref: (KH*KW*C_in, C_out)     weights, rows ordered (ky, kx, cin), bf16
      b_ref: (1, C_out)              bias, f32 (only present when add_bias)
      o_ref: (H_out, W_out, C_out)
    """
    def kernel(*refs):
        if add_bias:
            x_ref, w_ref, b_ref, o_ref = refs
        else:
            x_ref, w_ref, o_ref = refs
        H_out, W_out, C_out = o_ref.shape
        C_in = x_ref.shape[-1]
        M = H_out * W_out

        # im2col: build one (M, KH*KW*C_in) patch matrix from static slices.
        cols = []
        for dy in range(KH):
            for dx in range(KW):
                slab = x_ref[pl.ds(dy, H_out), pl.ds(dx, W_out), :]   # (H_out, W_out, C_in)
                cols.append(slab.reshape(M, C_in))
        patches = cols[0] if len(cols) == 1 else jnp.concatenate(cols, axis=-1)

        # Single MXU matmul: bf16 x bf16 operands, f32 accumulation.
        y = jnp.dot(patches, w_ref[...], preferred_element_type=jnp.float32)

        if add_bias:
            y = y + b_ref[...]                     # (1, C_out) broadcast, f32
        if apply_norm:                             # InstanceNorm2d(affine=False)
            mean = jnp.mean(y, axis=0, keepdims=True)
            var = jnp.mean(jnp.square(y - mean), axis=0, keepdims=True)
            y = (y - mean) * jax.lax.rsqrt(var + eps)
        if apply_leaky:                            # LeakyReLU(0.2)
            y = jnp.where(y >= 0, y, negative_slope * y)

        o_ref[...] = y.reshape(H_out, W_out, C_out).astype(o_ref.dtype)
    return kernel


def conv_block_pallas(x_nhwc, w_oihw, b, *, stride, padding,
                      apply_norm, apply_leaky, out_dtype):
    """One discriminator block on NHWC input, Pallas-fused."""
    N, H, W, C_in = x_nhwc.shape
    C_out, _, KH, KW = w_oihw.shape
    H_out = (H + 2 * padding - KH) // stride + 1
    W_out = (W + 2 * padding - KW) // stride + 1

    # bf16 activations into the kernel (halves activation DMA bytes).
    xp = jnp.pad(x_nhwc.astype(jnp.bfloat16),
                 ((0, 0), (padding, padding), (padding, padding), (0, 0)))
    w_hwio = jnp.transpose(w_oihw, (2, 3, 1, 0)).astype(jnp.float32)

    kh, kw, cin = KH, KW, C_in
    if stride == 2:
        # space-to-depth(2) of the padded input + matching weight rearrangement:
        # stride-2 k x k conv  ==  stride-1 (k/2 x k/2) conv on the s2d input.
        Hp, Wp = xp.shape[1], xp.shape[2]
        xp = jnp.pad(xp, ((0, 0), (0, Hp % 2), (0, Wp % 2), (0, 0)))
        Hp2, Wp2 = xp.shape[1], xp.shape[2]
        xp = (xp.reshape(N, Hp2 // 2, 2, Wp2 // 2, 2, C_in)
                .transpose(0, 1, 3, 2, 4, 5)
                .reshape(N, Hp2 // 2, Wp2 // 2, 4 * C_in))
        w_hwio = (w_hwio.reshape(KH // 2, 2, KW // 2, 2, C_in, C_out)
                        .transpose(0, 2, 1, 3, 4, 5)
                        .reshape(KH // 2, KW // 2, 4 * C_in, C_out))
        kh, kw, cin = KH // 2, KW // 2, 4 * C_in
    elif stride != 1:
        raise NotImplementedError("only stride 1 or 2")

    Kdim = kh * kw * cin
    w_flat = w_hwio.reshape(Kdim, C_out)

    # Lane-dense output: C_out=1 would force masked stores + an N=1 matmul; pad
    # the output channels to 128 and slice back in the wrapper.
    cout_k = 128 if C_out < 8 else C_out
    if cout_k != C_out:
        w_flat = jnp.pad(w_flat, ((0, 0), (0, cout_k - C_out)))
    w_flat = w_flat.astype(jnp.bfloat16)

    # InstanceNorm(affine=False) subtracts the per-channel mean, so the conv bias
    # is a mathematical no-op on norm layers -> drop it (and its DMA) entirely.
    add_bias = not apply_norm

    H_in, W_in = xp.shape[1], xp.shape[2]
    kernel = _make_conv_kernel(kh, kw, add_bias, apply_norm, apply_leaky)

    in_specs = [
        pl.BlockSpec((None, H_in, W_in, cin), lambda n: (n, 0, 0, 0)),
        pl.BlockSpec((Kdim, cout_k), lambda n: (0, 0)),
    ]
    args = [xp, w_flat]
    if add_bias:
        b_pad = b.astype(jnp.float32)
        if cout_k != C_out:
            b_pad = jnp.pad(b_pad, (0, cout_k - C_out))
        in_specs.append(pl.BlockSpec((1, cout_k), lambda n: (0, 0)))
        args.append(b_pad.reshape(1, cout_k))

    out = pl.pallas_call(
        kernel,
        out_shape=jax.ShapeDtypeStruct((N, H_out, W_out, cout_k), out_dtype),
        grid=(N,),
        in_specs=in_specs,
        out_specs=pl.BlockSpec((None, H_out, W_out, cout_k),
                               lambda n: (n, 0, 0, 0)),
        compiler_params=pltpu.CompilerParams(
            dimension_semantics=("parallel",),          # batch elems independent
            vmem_limit_bytes=32 * 1024 * 1024),
    )(*args)

    if cout_k != C_out:
        out = out[..., :C_out]
    return out


def init_params(key, input_nc=4, ndf=64, n_layers_D=3):
    """Deterministic synthetic parameters matching NLayerDiscriminator.__init__."""
    # (cin, cout, stride, has_instance_norm) per block; kernel 4x4, pad 2.
    blocks = [(input_nc, ndf, 2, False)]
    nf_prev = ndf
    for n in range(1, n_layers_D):
        nf = min(nf_prev * 2, 512)
        stride = 1 if n == n_layers_D - 1 else 2
        blocks.append((nf_prev, nf, stride, True))
        nf_prev = nf
    blocks.append((nf_prev, 1, 1, False))

    params = []
    for i, (cin, cout, stride, norm) in enumerate(blocks):
        key, k_w, k_b = jax.random.split(key, 3)
        w = 0.02 * jax.random.normal(k_w, (cout, cin, 4, 4), jnp.float32)  # OIHW
        bias = 0.02 * jax.random.normal(k_b, (cout,), jnp.float32)
        params.append(dict(w=w, b=bias, stride=stride, norm=norm,
                           leaky=(i < len(blocks) - 1)))
    return params


def nlayer_discriminator_forward(x_nchw, params):
    """Forward pass; returns only the final tensor (no_ganFeat_loss=True)."""
    # layout: NCHW (PyTorch) -> NHWC for the TPU kernels -> back to NCHW.
    x = jnp.transpose(x_nchw, (0, 2, 3, 1)).astype(jnp.float32)
    for i, p in enumerate(params):
        last = (i == len(params) - 1)
        x = conv_block_pallas(
            x, p["w"], p["b"], stride=p["stride"], padding=2,
            apply_norm=p["norm"], apply_leaky=p["leaky"],
            out_dtype=jnp.float32 if last else jnp.bfloat16)  # bf16 inter-layer acts
    return jnp.transpose(x, (0, 3, 1, 2))


def _reference_forward(x_nchw, params):
    """Pure-JAX (XLA) reference with matched matmul precision (bf16 ops, f32 acc)."""
    x = x_nchw.astype(jnp.float32)
    for p in params:
        y = jax.lax.conv_general_dilated(
            x.astype(jnp.bfloat16), p["w"].astype(jnp.bfloat16),
            window_strides=(p["stride"], p["stride"]),
            padding=[(2, 2), (2, 2)],
            dimension_numbers=("NCHW", "OIHW", "NCHW"),
            preferred_element_type=jnp.float32)
        y = y + p["b"][None, :, None, None]
        if p["norm"]:
            mean = jnp.mean(y, axis=(2, 3), keepdims=True)
            var = jnp.mean(jnp.square(y - mean), axis=(2, 3), keepdims=True)
            y = (y - mean) * jax.lax.rsqrt(var + 1e-5)
        if p["leaky"]:
            y = jnp.where(y >= 0, y, 0.2 * y)
        x = y
    return x


if __name__ == "__main__":
    key = jax.random.PRNGKey(0)
    k_x, k_p = jax.random.split(key)

    # input_nc=4, ndf=64 (module default), n_layers_D=3, small 16x16 images
    x = jax.random.normal(k_x, (2, 4, 16, 16), jnp.float32)   # NCHW
    params = init_params(k_p, input_nc=4, ndf=64, n_layers_D=3)

    out = nlayer_discriminator_forward(x, params)
    out = jax.block_until_ready(out)

    assert out.shape == (2, 1, 7, 7), f"unexpected output shape {out.shape}"

    ref = _reference_forward(x, params)
    np.testing.assert_allclose(np.asarray(out), np.asarray(ref),
                               rtol=5e-3, atol=5e-3)
    print("KERNEL_OK")
</pallas_src>

<mosaic_0001>
module attributes {stable_mosaic.version = 11 : i64} {
  func.func @kernel(%arg0: i32, %arg1: memref<1x10x10x16xbf16, #tpu.memory_space<vmem>>, %arg2: memref<64x64xbf16, #tpu.memory_space<vmem>>, %arg3: memref<1x64xf32, #tpu.memory_space<vmem>>, %arg4: memref<1x9x9x64xbf16, #tpu.memory_space<vmem>>) attributes {dimension_semantics = [#tpu.dimension_semantics<parallel>], iteration_bounds = array<i64: 2>, scalar_prefetch = 0 : i64, scratch_operands = 0 : i64, tpu.core_type = #tpu.core_type<tc>, window_params = [{transform_indices = @transform_0, window_bounds = array<i64: 1, 10, 10, 16>}, {pipeline_mode = #tpu.pipeline_mode<synchronous>, transform_indices = @transform_1, window_bounds = array<i64: 64, 64>}, {pipeline_mode = #tpu.pipeline_mode<synchronous>, transform_indices = @transform_2, window_bounds = array<i64: 1, 64>}, {transform_indices = @transform_3, window_bounds = array<i64: 1, 9, 9, 64>}]} {
    %c0 = arith.constant 0 : index
    %c0_0 = arith.constant 0 : index
    %c0_1 = arith.constant 0 : index
    %c0_2 = arith.constant 0 : index
    %0 = vector.load %arg1[%c0, %c0_0, %c0_1, %c0_2] : memref<1x10x10x16xbf16, #tpu.memory_space<vmem>>, vector<1x9x9x16xbf16>
    %1 = vector.shape_cast %0 : vector<1x9x9x16xbf16> to vector<9x9x16xbf16>
    %2 = vector.shape_cast %1 : vector<9x9x16xbf16> to vector<81x16xbf16>
    %c0_3 = arith.constant 0 : index
    %c0_4 = arith.constant 0 : index
    %c1 = arith.constant 1 : index
    %c0_5 = arith.constant 0 : index
    %3 = vector.load %arg1[%c0_3, %c0_4, %c1, %c0_5] : memref<1x10x10x16xbf16, #tpu.memory_space<vmem>>, vector<1x9x9x16xbf16>
    %4 = vector.shape_cast %3 : vector<1x9x9x16xbf16> to vector<9x9x16xbf16>
    %5 = vector.shape_cast %4 : vector<9x9x16xbf16> to vector<81x16xbf16>
    %c0_6 = arith.constant 0 : index
    %c1_7 = arith.constant 1 : index
    %c0_8 = arith.constant 0 : index
    %c0_9 = arith.constant 0 : index
    %6 = vector.load %arg1[%c0_6, %c1_7, %c0_8, %c0_9] : memref<1x10x10x16xbf16, #tpu.memory_space<vmem>>, vector<1x9x9x16xbf16>
    %7 = vector.shape_cast %6 : vector<1x9x9x16xbf16> to vector<9x9x16xbf16>
    %8 = vector.shape_cast %7 : vector<9x9x16xbf16> to vector<81x16xbf16>
    %c0_10 = arith.constant 0 : index
    %c1_11 = arith.constant 1 : index
    %c1_12 = arith.constant 1 : index
    %c0_13 = arith.constant 0 : index
    %9 = vector.load %arg1[%c0_10, %c1_11, %c1_12, %c0_13] : memref<1x10x10x16xbf16, #tpu.memory_space<vmem>>, vector<1x9x9x16xbf16>
    %10 = vector.shape_cast %9 : vector<1x9x9x16xbf16> to vector<9x9x16xbf16>
    %11 = vector.shape_cast %10 : vector<9x9x16xbf16> to vector<81x16xbf16>
    %12 = tpu.concatenate %2, %5, %8, %11 in 1 : vector<81x16xbf16>, vector<81x16xbf16>, vector<81x16xbf16>, vector<81x16xbf16> -> vector<81x64xbf16>
    %c0_14 = arith.constant 0 : index
    %c0_15 = arith.constant 0 : index
    %13 = vector.load %arg2[%c0_14, %c0_15] : memref<64x64xbf16, #tpu.memory_space<vmem>>, vector<64x64xbf16>
    %cst = arith.constant dense<0.000000e+00> : vector<81x64xf32>
    %14 = tpu.matmul %12, %13, %cst {dimension_numbers = #tpu.dot_dimension_numbers<[1], [0], [0], [1], [0, 0, 1, 1], [], []>} : vector<81x64xbf16>, vector<64x64xbf16>, vector<81x64xf32> -> vector<81x64xf32>
    %c0_16 = arith.constant 0 : index
    %c0_17 = arith.constant 0 : index
    %15 = vector.load %arg3[%c0_16, %c0_17] : memref<1x64xf32, #tpu.memory_space<vmem>>, vector<1x64xf32>
    %16 = vector.broadcast %15 : vector<1x64xf32> to vector<81x64xf32>
    %17 = arith.addf %14, %16 : vector<81x64xf32>
    %cst_18 = arith.constant 0.000000e+00 : f32
    %18 = vector.broadcast %cst_18 : f32 to vector<81x64xf32>
    %19 = arith.cmpf oge, %17, %18 : vector<81x64xf32>
    %cst_19 = arith.constant 2.000000e-01 : f32
    %20 = vector.broadcast %cst_19 : f32 to vector<81x64xf32>
    %21 = arith.mulf %20, %17 : vector<81x64xf32>
    %22 = arith.select %19, %17, %21 : vector<81x64xi1>, vector<81x64xf32>
    %23 = vector.shape_cast %22 : vector<81x64xf32> to vector<9x9x64xf32>
    %24 = arith.truncf %23 : vector<9x9x64xf32> to vector<9x9x64xbf16>
    %c0_20 = arith.constant 0 : index
    %c0_21 = arith.constant 0 : index
    %c0_22 = arith.constant 0 : index
    %c0_23 = arith.constant 0 : index
    %25 = vector.load %arg4[%c0_20, %c0_21, %c0_22, %c0_23] : memref<1x9x9x64xbf16, #tpu.memory_space<vmem>>, vector<1x9x9x64xbf16>
    %26 = vector.shape_cast %25 : vector<1x9x9x64xbf16> to vector<9x9x64xbf16>
    %27 = vector.shape_cast %24 : vector<9x9x64xbf16> to vector<1x9x9x64xbf16>
    tpu.vector_store %arg4[%c0_20, %c0_21, %c0_22, %c0_23], %27 {strides = array<i32>} : memref<1x9x9x64xbf16, #tpu.memory_space<vmem>>, vector<1x9x9x64xbf16>,
    return
  }
  func.func @transform_0(%arg0: i32) -> (i32, i32, i32, i32) {
    %c0_i32 = arith.constant 0 : i32
    %c0_i32_0 = arith.constant 0 : i32
    %c0_i32_1 = arith.constant 0 : i32
    %c0_i32_2 = arith.constant 0 : i32
    return %arg0, %c0_i32, %c0_i32_0, %c0_i32_1 : i32, i32, i32, i32
  }
  func.func @transform_1(%arg0: i32) -> (i32, i32) {
    %c0_i32 = arith.constant 0 : i32
    %c0_i32_0 = arith.constant 0 : i32
    %c0_i32_1 = arith.constant 0 : i32
    return %c0_i32, %c0_i32_0 : i32, i32
  }
  func.func @transform_2(%arg0: i32) -> (i32, i32) {
    %c0_i32 = arith.constant 0 : i32
    %c0_i32_0 = arith.constant 0 : i32
    %c0_i32_1 = arith.constant 0 : i32
    return %c0_i32, %c0_i32_0 : i32, i32
  }
  func.func @transform_3(%arg0: i32) -> (i32, i32, i32, i32) {
    %c0_i32 = arith.constant 0 : i32
    %c0_i32_0 = arith.constant 0 : i32
    %c0_i32_1 = arith.constant 0 : i32
    %c0_i32_2 = arith.constant 0 : i32
    return %arg0, %c0_i32, %c0_i32_0, %c0_i32_1 : i32, i32, i32, i32
  }
}

</mosaic_0001>

<llo_original>
// kernel: tpu_custom_call.1
$region0: #{tpu_custom_call.1}
  #allocation0 [shape = 'u32[]', space=smem, size = 0x4, offset = 0x4, fixed_abs, tag = 'smem constant byte address 0x4 - core index']
  #allocation1 [shape = 'u32[72,128]{1,0:T(1,128)}', space=vmem, size = 0x9000, scoped, tag = 'internal scratch']
  %s0 = inlined_call_operand.vmem [shape: bf16[2,10,10,16], index: 0, kind: input, shape index: {}]
  %s1 = inlined_call_operand.vmem [shape: bf16[64,64], index: 1, kind: input, shape index: {}]
  %s2 = inlined_call_operand.vmem [shape: f32[1,64], index: 2, kind: input, shape index: {}]
  %s3 = inlined_call_operand.vmem [shape: bf16[2,9,9,64], index: 3, kind: output, shape index: {}]
  %s4 = sld [smem:[#allocation0]]
  $region45: #{tpu_custom_call.1} parent=0
    _
  %s6 = ssub.s32 1, %s4
  %s7 = scalar_select 0, %s6, %s4
  loop: start=0, step=1, limit=4
  $region2: #{tpu_custom_call.1} parent=0 // loop_pre_header
    _
  $region3: #{tpu_custom_call.1} parent=0 // loop_header
    %s9 = sphi 0, %s13
    %p10 = scmp.ge.s32.totalorder %s9, 4
    %s19 = sphi 0, %s21
    %s22 = sphi 0, %s19
    %s23 = sphi 0, %s22
    %s39 = sphi 0, %s23
    %s43 = sphi 0, %s43
    %s45 = sphi 0, %s43
    %s46 = sphi 0, %s45
    %s60 = sphi 0, %s46
    %s64 = sphi 0, %s64
    %s66 = sphi 0, %s64
    %s67 = sphi 0, %s66
    %s81 = sphi 0, %s67
    %s87 = sphi 0, %s89
    %s90 = sphi 0, %s87
    %s91 = sphi 0, %s90
    %s107 = sphi 0, %s91
  $region4: #{tpu_custom_call.1} parent=0 // loop_header_branch
    %12 = sbr.rel (%p10) target = $region8
  $region5: #{tpu_custom_call.1} parent=0 // loop_body
    %s14 = ssub.s32 %s9, 1
    %s15 = ssub.s32 %s9, 2
    %s16 = sadd.s32 %s9, 1
    %s17 = ssub.s32 %s9, %s16
    %p18 = scmp.eq.s32.totalorder %s17, 0
    %s20 = sadd.s32 %s19, 1
    %s21 = scalar_select %p18, %s19, %s20
    %p24 = pneg %p18
    %p25 = scmp.eq.s32.totalorder %s9, 1
    %p26 = por %p24, %p25
    %p27 = scmp.ne.s32.totalorder %s19, %s22
    %p28 = scmp.eq.s32.totalorder %s9, 0
    %p29 = por %p27, %p28
    %p30 = scmp.ne.s32.totalorder %s19, %s22
    %p31 = scmp.eq.s32.totalorder %s14, 1
    %p32 = por %p30, %p31
    %p33 = scmp.ne.s32.totalorder %s22, %s23
    %p34 = scmp.eq.s32.totalorder %s14, 0
    %p35 = por %p33, %p34
    %p36 = scmp.ne.s32.totalorder %s22, %s23
    %p37 = scmp.eq.s32.totalorder %s15, 1
    %p38 = por %p36, %p37
    %p40 = scmp.ne.s32.totalorder %s23, %s39
    %p41 = scmp.eq.s32.totalorder %s15, 0
    %p42 = por %p40, %p41
    %s44 = sadd.s32 %s43, 1
    %p47 = scmp.eq.s32.totalorder %s9, 1
    %p48 = scmp.ne.s32.totalorder %s43, %s45
    %p49 = scmp.eq.s32.totalorder %s9, 0
    %p50 = por %p48, %p49
    %p51 = scmp.ne.s32.totalorder %s43, %s45
    %p52 = scmp.eq.s32.totalorder %s14, 1
    %p53 = por %p51, %p52
    %p54 = scmp.ne.s32.totalorder %s45, %s46
    %p55 = scmp.eq.s32.totalorder %s14, 0
    %p56 = por %p54, %p55
    %p57 = scmp.ne.s32.totalorder %s45, %s46
    %p58 = scmp.eq.s32.totalorder %s15, 1
    %p59 = por %p57, %p58
    %p61 = scmp.ne.s32.totalorder %s46, %s60
    %p62 = scmp.eq.s32.totalorder %s15, 0
    %p63 = por %p61, %p62
    %s65 = sadd.s32 %s64, 1
    %p68 = scmp.eq.s32.totalorder %s9, 1
    %p69 = scmp.ne.s32.totalorder %s64, %s66
    %p70 = scmp.eq.s32.totalorder %s9, 0
    %p71 = por %p69, %p70
    %p72 = scmp.ne.s32.totalorder %s64, %s66
    %p73 = scmp.eq.s32.totalorder %s14, 1
    %p74 = por %p72, %p73
    %p75 = scmp.ne.s32.totalorder %s66, %s67
    %p76 = scmp.eq.s32.totalorder %s14, 0
    %p77 = por %p75, %p76
    %p78 = scmp.ne.s32.totalorder %s66, %s67
    %p79 = scmp.eq.s32.totalorder %s15, 1
    %p80 = por %p78, %p79
    %p82 = scmp.ne.s32.totalorder %s67, %s81
    %p83 = scmp.eq.s32.totalorder %s15, 0
    %p84 = por %p82, %p83
    %s85 = ssub.s32 %s9, %s16
    %p86 = scmp.eq.s32.totalorder %s85, 0
    %s88 = sadd.s32 %s87, 1
    %s89 = scalar_select %p86, %s87, %s88
    %p92 = pneg %p86
    %p93 = scmp.eq.s32.totalorder %s9, 1
    %p94 = por %p92, %p93
    %p95 = scmp.ne.s32.totalorder %s87, %s90
    %p96 = scmp.eq.s32.totalorder %s9, 0
    %p97 = por %p95, %p96
    %p98 = scmp.ne.s32.totalorder %s87, %s90
    %p99 = scmp.eq.s32.totalorder %s14, 1
    %p100 = por %p98, %p99
    %p101 = scmp.ne.s32.totalorder %s90, %s91
    %p102 = scmp.eq.s32.totalorder %s14, 0
    %p103 = por %p101, %p102
    %p104 = scmp.ne.s32.totalorder %s90, %s91
    %p105 = scmp.eq.s32.totalorder %s15, 1
    %p106 = por %p104, %p105
    %p108 = scmp.ne.s32.totalorder %s91, %s107
    %p109 = scmp.eq.s32.totalorder %s15, 0
    %p110 = por %p108, %p109
    %p111 = scmp.le.s32.totalorder 1, %s9
    %p112 = scmp.lt.s32.totalorder %s9, 3
    %p113 = pnand %p111, %p112
    %p114 = pneg %p113
    // Predicated region
    $region9: #{tpu_custom_call.1} parent=5 // pred_check
      _
    $region10: #{tpu_custom_call.1} parent=5 // pred_check_branch
      %116 = sbr.rel (%p113) target = $region12
    $region11: #{tpu_custom_call.1} parent=5 // pred_region
      %s117 = ssub.s32 %s9, 1
      // Predicated region
      $region13: #{tpu_custom_call.1} parent=11 // pred_check
        %p118 = pneg %p56
      $region14: #{tpu_custom_call.1} parent=11 // pred_check_branch
        %120 = sbr.rel (%p118) target = $region16
      $region15: #{tpu_custom_call.1} parent=11 // pred_region
        _
      $region16: #{tpu_custom_call.1} parent=11 // pred_fallthru
        _
      // Predicated region
      $region17: #{tpu_custom_call.1} parent=11 // pred_check
        %p121 = pneg %p77
      $region18: #{tpu_custom_call.1} parent=11 // pred_check_branch
        %123 = sbr.rel (%p121) target = $region20
      $region19: #{tpu_custom_call.1} parent=11 // pred_region
        _
      $region20: #{tpu_custom_call.1} parent=11 // pred_fallthru
        _
    $region12: #{tpu_custom_call.1} parent=5 // pred_fallthru
      _
    %p124 = scmp.lt.s32.totalorder %s9, 2
    // Predicated region
    $region21: #{tpu_custom_call.1} parent=5 // pred_check
      %p125 = pneg %p124
    $region22: #{tpu_custom_call.1} parent=5 // pred_check_branch
      %127 = sbr.rel (%p125) target = $region24
    $region23: #{tpu_custom_call.1} parent=5 // pred_region
      // Predicated region
      $region25: #{tpu_custom_call.1} parent=23 // pred_check
        %p128 = pneg %p29
      $region26: #{tpu_custom_call.1} parent=23 // pred_check_branch
        %130 = sbr.rel (%p128) target = $region28
      $region27: #{tpu_custom_call.1} parent=23 // pred_region
        %p131 = scmp.lt.s32.totalorder %s9, 1
        %s132 = scalar_select %p131, %s9, 1
        %s133 = smul.addr %s132, 20
        %s134 = smul.addr %s133, 4
        %s135 = scalar_lea.vmem %s0, %s134
      $region28: #{tpu_custom_call.1} parent=23 // pred_fallthru
        _
    $region24: #{tpu_custom_call.1} parent=5 // pred_fallthru
      _
    %p136 = scmp.le.s32.totalorder 1, %s9
    %p137 = scmp.lt.s32.totalorder %s9, 3
    %p138 = pnand %p136, %p137
    %p139 = pneg %p138
    // Predicated region
    $region29: #{tpu_custom_call.1} parent=5 // pred_check
      _
    $region30: #{tpu_custom_call.1} parent=5 // pred_check_branch
      %141 = sbr.rel (%p138) target = $region32
    $region31: #{tpu_custom_call.1} parent=5 // pred_region
      %s142 = ssub.s32 %s9, 1
      %p143 = scmp.lt.s32.totalorder %s14, 1
      %s144 = scalar_select %p143, %s14, 1
      %s145 = smul.addr %s144, 20
      %s146 = smul.addr %s145, 4
      %s147 = scalar_lea.vmem %s0, %s146
      %p148 = pneg %p35
      %p149 = pneg %p32
      %p150 = pneg %p56
      %p151 = pneg %p53
      %p152 = pneg %p77
      %p153 = pneg %p74
      %p154 = pneg %p103
      %p155 = pneg %p100
      %p156 = scmp.lt.s32.totalorder %s14, 1
      %s157 = scalar_select %p156, %s14, 1
      %s158 = smul.addr %s157, 18
      %s159 = smul.addr %s158, 4
      %s160 = scalar_lea.vmem %s3, %s159
      %p161 = scmp.lt.s32.totalorder %s14, 1
      %s162 = scalar_select %p161, %s14, 1
      %s163 = smul.addr %s162, 20
      %s164 = smul.addr %s163, 4
      %s165 = scalar_lea.vmem %s0, %s164
      %p166 = scmp.lt.s32.totalorder %s14, 1
      %s167 = scalar_select %p166, %s14, 1
      %s168 = smul.addr %s167, 18
      %s169 = smul.addr %s168, 4
      %s170 = scalar_lea.vmem %s3, %s169
      %v172 = vld [vmem:[%s165] sm:$0xf]
      %v173 = vld [vmem:[%s165 + $0x4] sm:$0x1]
      %v174 = vld [vmem:[%s165 + $0x8] sm:$0xf]
      %v175 = vld [vmem:[%s165 + $0xc] sm:$0x1]
      %v176 = vld [vmem:[%s165 + $0x10] sm:$0xf]
      %v177 = vld [vmem:[%s165 + $0x14] sm:$0x1]
      %v178 = vld [vmem:[%s165 + $0x18] sm:$0xf]
      %v179 = vld [vmem:[%s165 + $0x1c] sm:$0x1]
      %v180 = vld [vmem:[%s165 + $0x20] sm:$0xf]
      %v181 = vld [vmem:[%s165 + $0x24] sm:$0x1]
      %v182 = vld [vmem:[%s165 + $0x28] sm:$0xf]
      %v183 = vld [vmem:[%s165 + $0x2c] sm:$0x1]
      %v184 = vld [vmem:[%s165 + $0x30] sm:$0xf]
      %v185 = vld [vmem:[%s165 + $0x34] sm:$0x1]
      %v186 = vld [vmem:[%s165 + $0x38] sm:$0xf]
      %v187 = vld [vmem:[%s165 + $0x3c] sm:$0x1]
      %v188 = vld [vmem:[%s165 + $0x40] sm:$0xf]
      %v189 = vld [vmem:[%s165 + $0x44] sm:$0x1]
      %v208 = vrot.slane %v172, 3
      %v209 = vrot.slane %v173, 3
      %v210 = vrot.slane %v174, 3
      %v211 = vrot.slane %v175, 3
      %v212 = vrot.slane %v176, 3
      %v213 = vrot.slane %v177, 3
      %v214 = vrot.slane %v178, 3
      %v215 = vrot.slane %v179, 3
      %v216 = vrot.slane %v180, 3
      %v217 = vrot.slane %v181, 3
      %v218 = vrot.slane %v182, 3
      %v219 = vrot.slane %v183, 3
      %v220 = vrot.slane %v184, 3
      %v221 = vrot.slane %v185, 3
      %v222 = vrot.slane %v186, 3
      %v223 = vrot.slane %v187, 3
      %v224 = vrot.slane %v188, 3
      %v225 = vrot.slane %v189, 3
      %vm226 = vcmask 1040384
      %v229 = vsel %vm226, %v172, %v208
      %vm231 = vcmask 1041409
      %v232 = vsel %vm231, %v172, %v208
      %v234 = vrot.slane %v232, 1
      %vm235 = vcmask 1042434
      %v236 = vsel %vm235, %v172, %v208
      %v238 = vrot.slane %v236, 2
      %vm239 = vcmask 1043459
      %v240 = vsel %vm239, %v172, %v208
      %v242 = vrot.slane %v240, 3
      %v245 = vsel %vm226, %v173, %v209
      %v249 = vsel %vm226, %v174, %v210
      %v251 = vsel %vm231, %v174, %v210
      %v253 = vrot.slane %v251, 1
      %v254 = vsel %vm235, %v174, %v210
      %v256 = vrot.slane %v254, 2
      %v257 = vsel %vm239, %v174, %v210
      %v259 = vrot.slane %v257, 3
      %v262 = vsel %vm226, %v175, %v211
      %v266 = vsel %vm226, %v176, %v212
      %v268 = vsel %vm231, %v176, %v212
      %v270 = vrot.slane %v268, 1
      %v271 = vsel %vm235, %v176, %v212
      %v273 = vrot.slane %v271, 2
      %v274 = vsel %vm239, %v176, %v212
      %v276 = vrot.slane %v274, 3
      %v279 = vsel %vm226, %v177, %v213
      %v283 = vsel %vm226, %v178, %v214
      %v285 = vsel %vm231, %v178, %v214
      %v287 = vrot.slane %v285, 1
      %v288 = vsel %vm235, %v178, %v214
      %v290 = vrot.slane %v288, 2
      %v291 = vsel %vm239, %v178, %v214
      %v293 = vrot.slane %v291, 3
      %v296 = vsel %vm226, %v179, %v215
      %v300 = vsel %vm226, %v180, %v216
      %v302 = vsel %vm231, %v180, %v216
      %v304 = vrot.slane %v302, 1
      %v305 = vsel %vm235, %v180, %v216
      %v307 = vrot.slane %v305, 2
      %v308 = vsel %vm239, %v180, %v216
      %v310 = vrot.slane %v308, 3
      %v313 = vsel %vm226, %v181, %v217
      %v317 = vsel %vm226, %v182, %v218
      %v319 = vsel %vm231, %v182, %v218
      %v321 = vrot.slane %v319, 1
      %v322 = vsel %vm235, %v182, %v218
      %v324 = vrot.slane %v322, 2
      %v325 = vsel %vm239, %v182, %v218
      %v327 = vrot.slane %v325, 3
      %v330 = vsel %vm226, %v183, %v219
      %v334 = vsel %vm226, %v184, %v220
      %v336 = vsel %vm231, %v184, %v220
      %v338 = vrot.slane %v336, 1
      %v339 = vsel %vm235, %v184, %v220
      %v341 = vrot.slane %v339, 2
      %v342 = vsel %vm239, %v184, %v220
      %v344 = vrot.slane %v342, 3
      %v347 = vsel %vm226, %v185, %v221
      %v351 = vsel %vm226, %v186, %v222
      %v353 = vsel %vm231, %v186, %v222
      %v355 = vrot.slane %v353, 1
      %v356 = vsel %vm235, %v186, %v222
      %v358 = vrot.slane %v356, 2
      %v359 = vsel %vm239, %v186, %v222
      %v361 = vrot.slane %v359, 3
      %v364 = vsel %vm226, %v187, %v223
      %v368 = vsel %vm226, %v188, %v224
      %v370 = vsel %vm231, %v188, %v224
      %v372 = vrot.slane %v370, 1
      %v373 = vsel %vm235, %v188, %v224
      %v375 = vrot.slane %v373, 2
      %v376 = vsel %vm239, %v188, %v224
      %v378 = vrot.slane %v376, 3
      %v381 = vsel %vm226, %v189, %v225
      %v383 = vunpack.i.l.s16 %v229
      %v384 = vunpack.i.h.s16 %v229
      %v385 = vunpack.i.l.s16 %v234
      %v386 = vunpack.i.h.s16 %v234
      %v387 = vunpack.i.l.s16 %v238
      %v388 = vunpack.i.h.s16 %v238
      %v389 = vunpack.i.l.s16 %v242
      %v390 = vunpack.i.h.s16 %v242
      %v391 = vunpack.i.l.s16 %v245
      %v392 = vunpack.i.l.s16 %v249
      %v393 = vunpack.i.h.s16 %v249
      %v394 = vunpack.i.l.s16 %v253
      %v395 = vunpack.i.h.s16 %v253
      %v396 = vunpack.i.l.s16 %v256
      %v397 = vunpack.i.h.s16 %v256
      %v398 = vunpack.i.l.s16 %v259
      %v399 = vunpack.i.h.s16 %v259
      %v400 = vunpack.i.l.s16 %v262
      %v401 = vunpack.i.l.s16 %v266
      %v402 = vunpack.i.h.s16 %v266
      %v403 = vunpack.i.l.s16 %v270
      %v404 = vunpack.i.h.s16 %v270
      %v405 = vunpack.i.l.s16 %v273
      %v406 = vunpack.i.h.s16 %v273
      %v407 = vunpack.i.l.s16 %v276
      %v408 = vunpack.i.h.s16 %v276
      %v409 = vunpack.i.l.s16 %v279
      %v410 = vunpack.i.l.s16 %v283
      %v411 = vunpack.i.h.s16 %v283
      %v412 = vunpack.i.l.s16 %v287
      %v413 = vunpack.i.h.s16 %v287
      %v414 = vunpack.i.l.s16 %v290
      %v415 = vunpack.i.h.s16 %v290
      %v416 = vunpack.i.l.s16 %v293
      %v417 = vunpack.i.h.s16 %v293
      %v418 = vunpack.i.l.s16 %v296
      %v419 = vunpack.i.l.s16 %v300
      %v420 = vunpack.i.h.s16 %v300
      %v421 = vunpack.i.l.s16 %v304
      %v422 = vunpack.i.h.s16 %v304
      %v423 = vunpack.i.l.s16 %v307
      %v424 = vunpack.i.h.s16 %v307
      %v425 = vunpack.i.l.s16 %v310
      %v426 = vunpack.i.h.s16 %v310
      %v427 = vunpack.i.l.s16 %v313
      %v428 = vunpack.i.l.s16 %v317
      %v429 = vunpack.i.h.s16 %v317
      %v430 = vunpack.i.l.s16 %v321
      %v431 = vunpack.i.h.s16 %v321
      %v432 = vunpack.i.l.s16 %v324
      %v433 = vunpack.i.h.s16 %v324
      %v434 = vunpack.i.l.s16 %v327
      %v435 = vunpack.i.h.s16 %v327
      %v436 = vunpack.i.l.s16 %v330
      %v437 = vunpack.i.l.s16 %v334
      %v438 = vunpack.i.h.s16 %v334
      %v439 = vunpack.i.l.s16 %v338
      %v440 = vunpack.i.h.s16 %v338
      %v441 = vunpack.i.l.s16 %v341
      %v442 = vunpack.i.h.s16 %v341
      %v443 = vunpack.i.l.s16 %v344
      %v444 = vunpack.i.h.s16 %v344
      %v445 = vunpack.i.l.s16 %v347
      %v446 = vunpack.i.l.s16 %v351
      %v447 = vunpack.i.h.s16 %v351
      %v448 = vunpack.i.l.s16 %v355
      %v449 = vunpack.i.h.s16 %v355
      %v450 = vunpack.i.l.s16 %v358
      %v451 = vunpack.i.h.s16 %v358
      %v452 = vunpack.i.l.s16 %v361
      %v453 = vunpack.i.h.s16 %v361
      %v454 = vunpack.i.l.s16 %v364
      %v455 = vunpack.i.l.s16 %v368
      %v456 = vunpack.i.h.s16 %v368
      %v457 = vunpack.i.l.s16 %v372
      %v458 = vunpack.i.h.s16 %v372
      %v459 = vunpack.i.l.s16 %v375
      %v460 = vunpack.i.h.s16 %v375
      %v461 = vunpack.i.l.s16 %v378
      %v462 = vunpack.i.h.s16 %v378
      %v463 = vunpack.i.l.s16 %v381
      %v464 = vunpack.i.h.s16 %v245
      %v465 = vunpack.i.h.s16 %v262
      %v466 = vunpack.i.h.s16 %v279
      %v467 = vunpack.i.h.s16 %v296
      %v468 = vunpack.i.h.s16 %v313
      %v469 = vunpack.i.h.s16 %v330
      %v470 = vunpack.i.h.s16 %v347
      %v471 = vunpack.i.h.s16 %v364
      %v472 = vunpack.i.h.s16 %v381
      %s473 = scalar_lea.vmem %s165, 8
      %v474 = vld [vmem:[%s473] sm:$0xf]
      %v475 = vld [vmem:[%s473 + $0x4] sm:$0x1]
      %v476 = vld [vmem:[%s473 + $0x8] sm:$0xf]
      %v477 = vld [vmem:[%s473 + $0xc] sm:$0x1]
      %v478 = vld [vmem:[%s473 + $0x10] sm:$0xf]
      %v479 = vld [vmem:[%s473 + $0x14] sm:$0x1]
      %v480 = vld [vmem:[%s473 + $0x18] sm:$0xf]
      %v481 = vld [vmem:[%s473 + $0x1c] sm:$0x1]
      %v482 = vld [vmem:[%s473 + $0x20] sm:$0xf]
      %v483 = vld [vmem:[%s473 + $0x24] sm:$0x1]
      %v484 = vld [vmem:[%s473 + $0x28] sm:$0xf]
      %v485 = vld [vmem:[%s473 + $0x2c] sm:$0x1]
      %v486 = vld [vmem:[%s473 + $0x30] sm:$0xf]
      %v487 = vld [vmem:[%s473 + $0x34] sm:$0x1]
      %v488 = vld [vmem:[%s473 + $0x38] sm:$0xf]
      %v489 = vld [vmem:[%s473 + $0x3c] sm:$0x1]
      %v490 = vld [vmem:[%s473 + $0x40] sm:$0xf]
      %v491 = vld [vmem:[%s473 + $0x44] sm:$0x1]
      %v510 = vrot.slane %v474, 3
      %v511 = vrot.slane %v475, 3
      %v512 = vrot.slane %v476, 3
      %v513 = vrot.slane %v477, 3
      %v514 = vrot.slane %v478, 3
      %v515 = vrot.slane %v479, 3
      %v516 = vrot.slane %v480, 3
      %v517 = vrot.slane %v481, 3
      %v518 = vrot.slane %v482, 3
      %v519 = vrot.slane %v483, 3
      %v520 = vrot.slane %v484, 3
      %v521 = vrot.slane %v485, 3
      %v522 = vrot.slane %v486, 3
      %v523 = vrot.slane %v487, 3
      %v524 = vrot.slane %v488, 3
      %v525 = vrot.slane %v489, 3
      %v526 = vrot.slane %v490, 3
      %v527 = vrot.slane %v491, 3
      %v530 = vsel %vm226, %v474, %v510
      %v532 = vsel %vm231, %v474, %v510
      %v534 = vrot.slane %v532, 1
      %v535 = vsel %vm235, %v474, %v510
      %v537 = vrot.slane %v535, 2
      %v538 = vsel %vm239, %v474, %v510
      %v540 = vrot.slane %v538, 3
      %v543 = vsel %vm226, %v475, %v511
      %v547 = vsel %vm226, %v476, %v512
      %v549 = vsel %vm231, %v476, %v512
      %v551 = vrot.slane %v549, 1
      %v552 = vsel %vm235, %v476, %v512
      %v554 = vrot.slane %v552, 2
      %v555 = vsel %vm239, %v476, %v512
      %v557 = vrot.slane %v555, 3
      %v560 = vsel %vm226, %v477, %v513
      %v564 = vsel %vm226, %v478, %v514
      %v566 = vsel %vm231, %v478, %v514
      %v568 = vrot.slane %v566, 1
      %v569 = vsel %vm235, %v478, %v514
      %v571 = vrot.slane %v569, 2
      %v572 = vsel %vm239, %v478, %v514
      %v574 = vrot.slane %v572, 3
      %v577 = vsel %vm226, %v479, %v515
      %v581 = vsel %vm226, %v480, %v516
      %v583 = vsel %vm231, %v480, %v516
      %v585 = vrot.slane %v583, 1
      %v586 = vsel %vm235, %v480, %v516
      %v588 = vrot.slane %v586, 2
      %v589 = vsel %vm239, %v480, %v516
      %v591 = vrot.slane %v589, 3
      %v594 = vsel %vm226, %v481, %v517
      %v598 = vsel %vm226, %v482, %v518
      %v600 = vsel %vm231, %v482, %v518
      %v602 = vrot.slane %v600, 1
      %v603 = vsel %vm235, %v482, %v518
      %v605 = vrot.slane %v603, 2
      %v606 = vsel %vm239, %v482, %v518
      %v608 = vrot.slane %v606, 3
      %v611 = vsel %vm226, %v483, %v519
      %v615 = vsel %vm226, %v484, %v520
      %v617 = vsel %vm231, %v484, %v520
      %v619 = vrot.slane %v617, 1
      %v620 = vsel %vm235, %v484, %v520
      %v622 = vrot.slane %v620, 2
      %v623 = vsel %vm239, %v484, %v520
      %v625 = vrot.slane %v623, 3
      %v628 = vsel %vm226, %v485, %v521
      %v632 = vsel %vm226, %v486, %v522
      %v634 = vsel %vm231, %v486, %v522
      %v636 = vrot.slane %v634, 1
      %v637 = vsel %vm235, %v486, %v522
      %v639 = vrot.slane %v637, 2
      %v640 = vsel %vm239, %v486, %v522
      %v642 = vrot.slane %v640, 3
      %v645 = vsel %vm226, %v487, %v523
      %v649 = vsel %vm226, %v488, %v524
      %v651 = vsel %vm231, %v488, %v524
      %v653 = vrot.slane %v651, 1
      %v654 = vsel %vm235, %v488, %v524
      %v656 = vrot.slane %v654, 2
      %v657 = vsel %vm239, %v488, %v524
      %v659 = vrot.slane %v657, 3
      %v662 = vsel %vm226, %v489, %v525
      %v666 = vsel %vm226, %v490, %v526
      %v668 = vsel %vm231, %v490, %v526
      %v670 = vrot.slane %v668, 1
      %v671 = vsel %vm235, %v490, %v526
      %v673 = vrot.slane %v671, 2
      %v674 = vsel %vm239, %v490, %v526
      %v676 = vrot.slane %v674, 3
      %v679 = vsel %vm226, %v491, %v527
      %v681 = vunpack.i.l.s16 %v530
      %v682 = vunpack.i.h.s16 %v530
      %v683 = vunpack.i.l.s16 %v534
      %v684 = vunpack.i.h.s16 %v534
      %v685 = vunpack.i.l.s16 %v537
      %v686 = vunpack.i.h.s16 %v537
      %v687 = vunpack.i.l.s16 %v540
      %v688 = vunpack.i.h.s16 %v540
      %v689 = vunpack.i.l.s16 %v543
      %v690 = vunpack.i.l.s16 %v547
      %v691 = vunpack.i.h.s16 %v547
      %v692 = vunpack.i.l.s16 %v551
      %v693 = vunpack.i.h.s16 %v551
      %v694 = vunpack.i.l.s16 %v554
      %v695 = vunpack.i.h.s16 %v554
      %v696 = vunpack.i.l.s16 %v557
      %v697 = vunpack.i.h.s16 %v557
      %v698 = vunpack.i.l.s16 %v560
      %v699 = vunpack.i.l.s16 %v564
      %v700 = vunpack.i.h.s16 %v564
      %v701 = vunpack.i.l.s16 %v568
      %v702 = vunpack.i.h.s16 %v568
      %v703 = vunpack.i.l.s16 %v571
      %v704 = vunpack.i.h.s16 %v571
      %v705 = vunpack.i.l.s16 %v574
      %v706 = vunpack.i.h.s16 %v574
      %v707 = vunpack.i.l.s16 %v577
      %v708 = vunpack.i.l.s16 %v581
      %v709 = vunpack.i.h.s16 %v581
      %v710 = vunpack.i.l.s16 %v585
      %v711 = vunpack.i.h.s16 %v585
      %v712 = vunpack.i.l.s16 %v588
      %v713 = vunpack.i.h.s16 %v588
      %v714 = vunpack.i.l.s16 %v591
      %v715 = vunpack.i.h.s16 %v591
      %v716 = vunpack.i.l.s16 %v594
      %v717 = vunpack.i.l.s16 %v598
      %v718 = vunpack.i.h.s16 %v598
      %v719 = vunpack.i.l.s16 %v602
      %v720 = vunpack.i.h.s16 %v602
      %v721 = vunpack.i.l.s16 %v605
      %v722 = vunpack.i.h.s16 %v605
      %v723 = vunpack.i.l.s16 %v608
      %v724 = vunpack.i.h.s16 %v608
      %v725 = vunpack.i.l.s16 %v611
      %v726 = vunpack.i.l.s16 %v615
      %v727 = vunpack.i.h.s16 %v615
      %v728 = vunpack.i.l.s16 %v619
      %v729 = vunpack.i.h.s16 %v619
      %v730 = vunpack.i.l.s16 %v622
      %v731 = vunpack.i.h.s16 %v622
      %v732 = vunpack.i.l.s16 %v625
      %v733 = vunpack.i.h.s16 %v625
      %v734 = vunpack.i.l.s16 %v628
      %v735 = vunpack.i.l.s16 %v632
      %v736 = vunpack.i.h.s16 %v632
      %v737 = vunpack.i.l.s16 %v636
      %v738 = vunpack.i.h.s16 %v636
      %v739 = vunpack.i.l.s16 %v639
      %v740 = vunpack.i.h.s16 %v639
      %v741 = vunpack.i.l.s16 %v642
      %v742 = vunpack.i.h.s16 %v642
      %v743 = vunpack.i.l.s16 %v645
      %v744 = vunpack.i.l.s16 %v649
      %v745 = vunpack.i.h.s16 %v649
      %v746 = vunpack.i.l.s16 %v653
      %v747 = vunpack.i.h.s16 %v653
      %v748 = vunpack.i.l.s16 %v656
      %v749 = vunpack.i.h.s16 %v656
      %v750 = vunpack.i.l.s16 %v659
      %v751 = vunpack.i.h.s16 %v659
      %v752 = vunpack.i.l.s16 %v662
      %v753 = vunpack.i.l.s16 %v666
      %v754 = vunpack.i.h.s16 %v666
      %v755 = vunpack.i.l.s16 %v670
      %v756 = vunpack.i.h.s16 %v670
      %v757 = vunpack.i.l.s16 %v673
      %v758 = vunpack.i.h.s16 %v673
      %v759 = vunpack.i.l.s16 %v676
      %v760 = vunpack.i.h.s16 %v676
      %v761 = vunpack.i.l.s16 %v679
      %v762 = vunpack.i.h.s16 %v543
      %v763 = vunpack.i.h.s16 %v560
      %v764 = vunpack.i.h.s16 %v577
      %v765 = vunpack.i.h.s16 %v594
      %v766 = vunpack.i.h.s16 %v611
      %v767 = vunpack.i.h.s16 %v628
      %v768 = vunpack.i.h.s16 %v645
      %v769 = vunpack.i.h.s16 %v662
      %v770 = vunpack.i.h.s16 %v679
      %v771 = vpack.i.b16 %v384, %v383
      %v772 = vpack.i.b16 %v386, %v385
      %v773 = vpack.i.b16 %v388, %v387
      %v774 = vpack.i.b16 %v390, %v389
      %v775 = vpack.i.b16 %v392, %v391
      %v776 = vpack.i.b16 %v394, %v393
      %v777 = vpack.i.b16 %v396, %v395
      %v778 = vpack.i.b16 %v398, %v397
      %v779 = vpack.i.b16 %v400, %v399
      %v780 = vpack.i.b16 %v402, %v401
      %v781 = vpack.i.b16 %v404, %v403
      %v782 = vpack.i.b16 %v406, %v405
      %v783 = vpack.i.b16 %v408, %v407
      %v784 = vpack.i.b16 %v410, %v409
      %v785 = vpack.i.b16 %v412, %v411
      %v786 = vpack.i.b16 %v414, %v413
      %v787 = vpack.i.b16 %v416, %v415
      %v788 = vpack.i.b16 %v418, %v417
      %v789 = vpack.i.b16 %v420, %v419
      %v790 = vpack.i.b16 %v422, %v421
      %v791 = vpack.i.b16 %v424, %v423
      %v792 = vpack.i.b16 %v426, %v425
      %v793 = vpack.i.b16 %v428, %v427
      %v794 = vpack.i.b16 %v430, %v429
      %v795 = vpack.i.b16 %v432, %v431
      %v796 = vpack.i.b16 %v434, %v433
      %v797 = vpack.i.b16 %v436, %v435
      %v798 = vpack.i.b16 %v438, %v437
      %v799 = vpack.i.b16 %v440, %v439
      %v800 = vpack.i.b16 %v442, %v441
      %v801 = vpack.i.b16 %v444, %v443
      %v802 = vpack.i.b16 %v446, %v445
      %v803 = vpack.i.b16 %v448, %v447
      %v804 = vpack.i.b16 %v450, %v449
      %v805 = vpack.i.b16 %v452, %v451
      %v806 = vpack.i.b16 %v454, %v453
      %v807 = vpack.i.b16 %v456, %v455
      %v808 = vpack.i.b16 %v458, %v457
      %v809 = vpack.i.b16 %v460, %v459
      %v810 = vpack.i.b16 %v462, %v461
      %813 = vst [vmem:[#allocation1] ss:$9 sm:$0xff] %v771
      %s815 = scalar_lea.vmem [#allocation1], 1
      %816 = vst [vmem:[%s815] ss:$9 sm:$0xff] %v772
      %s818 = scalar_lea.vmem [#allocation1], 2
      %819 = vst [vmem:[%s818] ss:$9 sm:$0xff] %v773
      %s821 = scalar_lea.vmem [#allocation1], 3
      %822 = vst [vmem:[%s821] ss:$9 sm:$0xff] %v774
      %s824 = scalar_lea.vmem [#allocation1], 4
      %825 = vst [vmem:[%s824] ss:$9 sm:$0xff] %v775
      %s827 = scalar_lea.vmem [#allocation1], 5
      %828 = vst [vmem:[%s827] ss:$9 sm:$0xff] %v776
      %s830 = scalar_lea.vmem [#allocation1], 6
      %831 = vst [vmem:[%s830] ss:$9 sm:$0xff] %v777
      %s833 = scalar_lea.vmem [#allocation1], 7
      %834 = vst [vmem:[%s833] ss:$9 sm:$0xff] %v778
      %v835 = vld [vmem:[#allocation1] sm:$0xff]
      %837 = vst [vmem:[#allocation1] ss:$9 sm:$0xff] %v779
      %839 = vst [vmem:[%s815] ss:$9 sm:$0xff] %v780
      %841 = vst [vmem:[%s818] ss:$9 sm:$0xff] %v781
      %843 = vst [vmem:[%s821] ss:$9 sm:$0xff] %v782
      %845 = vst [vmem:[%s824] ss:$9 sm:$0xff] %v783
      %847 = vst [vmem:[%s827] ss:$9 sm:$0xff] %v784
      %849 = vst [vmem:[%s830] ss:$9 sm:$0xff] %v785
      %851 = vst [vmem:[%s833] ss:$9 sm:$0xff] %v786
      %v852 = vld [vmem:[#allocation1] sm:$0xff]
      %854 = vst [vmem:[#allocation1] ss:$9 sm:$0xff] %v787
      %856 = vst [vmem:[%s815] ss:$9 sm:$0xff] %v788
      %858 = vst [vmem:[%s818] ss:$9 sm:$0xff] %v789
      %860 = vst [vmem:[%s821] ss:$9 sm:$0xff] %v790
      %862 = vst [vmem:[%s824] ss:$9 sm:$0xff] %v791
      %864 = vst [vmem:[%s827] ss:$9 sm:$0xff] %v792
      %866 = vst [vmem:[%s830] ss:$9 sm:$0xff] %v793
      %868 = vst [vmem:[%s833] ss:$9 sm:$0xff] %v794
      %v869 = vld [vmem:[#allocation1] sm:$0xff]
      %871 = vst [vmem:[#allocation1] ss:$9 sm:$0xff] %v795
      %873 = vst [vmem:[%s815] ss:$9 sm:$0xff] %v796
      %875 = vst [vmem:[%s818] ss:$9 sm:$0xff] %v797
      %877 = vst [vmem:[%s821] ss:$9 sm:$0xff] %v798
      %879 = vst [vmem:[%s824] ss:$9 sm:$0xff] %v799
      %881 = vst [vmem:[%s827] ss:$9 sm:$0xff] %v800
      %883 = vst [vmem:[%s830] ss:$9 sm:$0xff] %v801
      %885 = vst [vmem:[%s833] ss:$9 sm:$0xff] %v802
      %v886 = vld [vmem:[#allocation1] sm:$0xff]
      %888 = vst [vmem:[#allocation1] ss:$9 sm:$0xff] %v803
      %890 = vst [vmem:[%s815] ss:$9 sm:$0xff] %v804
      %892 = vst [vmem:[%s818] ss:$9 sm:$0xff] %v805
      %894 = vst [vmem:[%s821] ss:$9 sm:$0xff] %v806
      %896 = vst [vmem:[%s824] ss:$9 sm:$0xff] %v807
      %898 = vst [vmem:[%s827] ss:$9 sm:$0xff] %v808
      %900 = vst [vmem:[%s830] ss:$9 sm:$0xff] %v809
      %902 = vst [vmem:[%s833] ss:$9 sm:$0xff] %v810
      %v903 = vld [vmem:[#allocation1] sm:$0xff]
      %905 = vst [vmem:[#allocation1] ss:$9 sm:$0xff] %v463
      %v906 = vld [vmem:[#allocation1] sm:$0xff]
      %v907 = vpack.i.b16 %v385, %v384
      %v908 = vpack.i.b16 %v387, %v386
      %v909 = vpack.i.b16 %v389, %v388
      %v910 = vpack.i.b16 %v391, %v390
      %v911 = vpack.i.b16 %v393, %v464
      %v912 = vpack.i.b16 %v395, %v394
      %v913 = vpack.i.b16 %v397, %v396
      %v914 = vpack.i.b16 %v399, %v398
      %v915 = vpack.i.b16 %v465, %v400
      %v916 = vpack.i.b16 %v403, %v402
      %v917 = vpack.i.b16 %v405, %v404
      %v918 = vpack.i.b16 %v407, %v406
      %v919 = vpack.i.b16 %v409, %v408
      %v920 = vpack.i.b16 %v411, %v466
      %v921 = vpack.i.b16 %v413, %v412
      %v922 = vpack.i.b16 %v415, %v414
      %v923 = vpack.i.b16 %v417, %v416
      %v924 = vpack.i.b16 %v467, %v418
      %v925 = vpack.i.b16 %v421, %v420
      %v926 = vpack.i.b16 %v423, %v422
      %v927 = vpack.i.b16 %v425, %v424
      %v928 = vpack.i.b16 %v427, %v426
      %v929 = vpack.i.b16 %v429, %v468
      %v930 = vpack.i.b16 %v431, %v430
      %v931 = vpack.i.b16 %v433, %v432
      %v932 = vpack.i.b16 %v435, %v434
      %v933 = vpack.i.b16 %v469, %v436
      %v934 = vpack.i.b16 %v439, %v438
      %v935 = vpack.i.b16 %v441, %v440
      %v936 = vpack.i.b16 %v443, %v442
      %v937 = vpack.i.b16 %v445, %v444
      %v938 = vpack.i.b16 %v447, %v470
      %v939 = vpack.i.b16 %v449, %v448
      %v940 = vpack.i.b16 %v451, %v450
      %v941 = vpack.i.b16 %v453, %v452
      %v942 = vpack.i.b16 %v471, %v454
      %v943 = vpack.i.b16 %v457, %v456
      %v944 = vpack.i.b16 %v459, %v458
      %v945 = vpack.i.b16 %v461, %v460
      %v946 = vpack.i.b16 %v463, %v462
      %949 = vst [vmem:[#allocation1] ss:$9 sm:$0xff] %v907
      %s951 = scalar_lea.vmem [#allocation1], 1
      %952 = vst [vmem:[%s951] ss:$9 sm:$0xff] %v908
      %s954 = scalar_lea.vmem [#allocation1], 2
      %955 = vst [vmem:[%s954] ss:$9 sm:$0xff] %v909
      %s957 = scalar_lea.vmem [#allocation1], 3
      %958 = vst [vmem:[%s957] ss:$9 sm:$0xff] %v910
      %s960 = scalar_lea.vmem [#allocation1], 4
      %961 = vst [vmem:[%s960] ss:$9 sm:$0xff] %v911
      %s963 = scalar_lea.vmem [#allocation1], 5
      %964 = vst [vmem:[%s963] ss:$9 sm:$0xff] %v912
      %s966 = scalar_lea.vmem [#allocation1], 6
      %967 = vst [vmem:[%s966] ss:$9 sm:$0xff] %v913
      %s969 = scalar_lea.vmem [#allocation1], 7
      %970 = vst [vmem:[%s969] ss:$9 sm:$0xff] %v914
      %v971 = vld [vmem:[#allocation1] sm:$0xff]
      %974 = vst [vmem:[#allocation1] ss:$9 sm:$0xff] %v915
      %976 = vst [vmem:[%s951] ss:$9 sm:$0xff] %v916
      %978 = vst [vmem:[%s954] ss:$9 sm:$0xff] %v917
      %980 = vst [vmem:[%s957] ss:$9 sm:$0xff] %v918
      %982 = vst [vmem:[%s960] ss:$9 sm:$0xff] %v919
      %984 = vst [vmem:[%s963] ss:$9 sm:$0xff] %v920
      %986 = vst [vmem:[%s966] ss:$9 sm:$0xff] %v921
      %988 = vst [vmem:[%s969] ss:$9 sm:$0xff] %v922
      %v989 = vld [vmem:[#allocation1] sm:$0xff]
      %992 = vst [vmem:[#allocation1] ss:$9 sm:$0xff] %v923
      %994 = vst [vmem:[%s951] ss:$9 sm:$0xff] %v924
      %996 = vst [vmem:[%s954] ss:$9 sm:$0xff] %v925
      %998 = vst [vmem:[%s957] ss:$9 sm:$0xff] %v926
      %1000 = vst [vmem:[%s960] ss:$9 sm:$0xff] %v927
      %1002 = vst [vmem:[%s963] ss:$9 sm:$0xff] %v928
      %1004 = vst [vmem:[%s966] ss:$9 sm:$0xff] %v929
      %1006 = vst [vmem:[%s969] ss:$9 sm:$0xff] %v930
      %v1007 = vld [vmem:[#allocation1] sm:$0xff]
      %1010 = vst [vmem:[#allocation1] ss:$9 sm:$0xff] %v931
      %1012 = vst [vmem:[%s951] ss:$9 sm:$0xff] %v932
      %1014 = vst [vmem:[%s954] ss:$9 sm:$0xff] %v933
      %1016 = vst [vmem:[%s957] ss:$9 sm:$0xff] %v934
      %1018 = vst [vmem:[%s960] ss:$9 sm:$0xff] %v935
      %1020 = vst [vmem:[%s963] ss:$9 sm:$0xff] %v936
      %1022 = vst [vmem:[%s966] ss:$9 sm:$0xff] %v937
      %1024 = vst [vmem:[%s969] ss:$9 sm:$0xff] %v938
      %v1025 = vld [vmem:[#allocation1] sm:$0xff]
      %1028 = vst [vmem:[#allocation1] ss:$9 sm:$0xff] %v939
      %1030 = vst [vmem:[%s951] ss:$9 sm:$0xff] %v940
      %1032 = vst [vmem:[%s954] ss:$9 sm:$0xff] %v941
      %1034 = vst [vmem:[%s957] ss:$9 sm:$0xff] %v942
      %1036 = vst [vmem:[%s960] ss:$9 sm:$0xff] %v943
      %1038 = vst [vmem:[%s963] ss:$9 sm:$0xff] %v944
      %1040 = vst [vmem:[%s966] ss:$9 sm:$0xff] %v945
      %1042 = vst [vmem:[%s969] ss:$9 sm:$0xff] %v946
      %v1043 = vld [vmem:[#allocation1] sm:$0xff]
      %1046 = vst [vmem:[#allocation1] ss:$9 sm:$0xff] %v472
      %v1047 = vld [vmem:[#allocation1] sm:$0xff]
      %1049 = vrot.lane.b32.xlu0 %v971, 16
      %v1050 = vpop.permute.xlu0 %1049
      %1051 = vrot.lane.b32.xlu0 %v989, 16
      %v1052 = vpop.permute.xlu0 %1051
      %1053 = vrot.lane.b32.xlu0 %v1007, 16
      %v1054 = vpop.permute.xlu0 %1053
      %1055 = vrot.lane.b32.xlu0 %v1025, 16
      %v1056 = vpop.permute.xlu0 %1055
      %1057 = vrot.lane.b32.xlu0 %v1043, 16
      %v1058 = vpop.permute.xlu0 %1057
      %1059 = vrot.lane.b32.xlu0 %v1047, 16
      %v1060 = vpop.permute.xlu0 %1059
      %v1061 = vpack.i.b16 %v682, %v681
      %v1062 = vpack.i.b16 %v684, %v683
      %v1063 = vpack.i.b16 %v686, %v685
      %v1064 = vpack.i.b16 %v688, %v687
      %v1065 = vpack.i.b16 %v690, %v689
      %v1066 = vpack.i.b16 %v692, %v691
      %v1067 = vpack.i.b16 %v694, %v693
      %v1068 = vpack.i.b16 %v696, %v695
      %v1069 = vpack.i.b16 %v698, %v697
      %v1070 = vpack.i.b16 %v700, %v699
      %v1071 = vpack.i.b16 %v702, %v701
      %v1072 = vpack.i.b16 %v704, %v703
      %v1073 = vpack.i.b16 %v706, %v705
      %v1074 = vpack.i.b16 %v708, %v707
      %v1075 = vpack.i.b16 %v710, %v709
      %v1076 = vpack.i.b16 %v712, %v711
      %v1077 = vpack.i.b16 %v714, %v713
      %v1078 = vpack.i.b16 %v716, %v715
      %v1079 = vpack.i.b16 %v718, %v717
      %v1080 = vpack.i.b16 %v720, %v719
      %v1081 = vpack.i.b16 %v722, %v721
      %v1082 = vpack.i.b16 %v724, %v723
      %v1083 = vpack.i.b16 %v726, %v725
      %v1084 = vpack.i.b16 %v728, %v727
      %v1085 = vpack.i.b16 %v730, %v729
      %v1086 = vpack.i.b16 %v732, %v731
      %v1087 = vpack.i.b16 %v734, %v733
      %v1088 = vpack.i.b16 %v736, %v735
      %v1089 = vpack.i.b16 %v738, %v737
      %v1090 = vpack.i.b16 %v740, %v739
      %v1091 = vpack.i.b16 %v742, %v741
      %v1092 = vpack.i.b16 %v744, %v743
      %v1093 = vpack.i.b16 %v746, %v745
      %v1094 = vpack.i.b16 %v748, %v747
      %v1095 = vpack.i.b16 %v750, %v749
      %v1096 = vpack.i.b16 %v752, %v751
      %v1097 = vpack.i.b16 %v754, %v753
      %v1098 = vpack.i.b16 %v756, %v755
      %v1099 = vpack.i.b16 %v758, %v757
      %v1100 = vpack.i.b16 %v760, %v759
      %1103 = vst [vmem:[#allocation1] ss:$9 sm:$0xff] %v1061
      %s1105 = scalar_lea.vmem [#allocation1], 1
      %1106 = vst [vmem:[%s1105] ss:$9 sm:$0xff] %v1062
      %s1108 = scalar_lea.vmem [#allocation1], 2
      %1109 = vst [vmem:[%s1108] ss:$9 sm:$0xff] %v1063
      %s1111 = scalar_lea.vmem [#allocation1], 3
      %1112 = vst [vmem:[%s1111] ss:$9 sm:$0xff] %v1064
      %s1114 = scalar_lea.vmem [#allocation1], 4
      %1115 = vst [vmem:[%s1114] ss:$9 sm:$0xff] %v1065
      %s1117 = scalar_lea.vmem [#allocation1], 5
      %1118 = vst [vmem:[%s1117] ss:$9 sm:$0xff] %v1066
      %s1120 = scalar_lea.vmem [#allocation1], 6
      %1121 = vst [vmem:[%s1120] ss:$9 sm:$0xff] %v1067
      %s1123 = scalar_lea.vmem [#allocation1], 7
      %1124 = vst [vmem:[%s1123] ss:$9 sm:$0xff] %v1068
      %v1125 = vld [vmem:[#allocation1] sm:$0xff]
      %1128 = vst [vmem:[#allocation1] ss:$9 sm:$0xff] %v1069
      %1130 = vst [vmem:[%s1105] ss:$9 sm:$0xff] %v1070
      %1132 = vst [vmem:[%s1108] ss:$9 sm:$0xff] %v1071
      %1134 = vst [vmem:[%s1111] ss:$9 sm:$0xff] %v1072
      %1136 = vst [vmem:[%s1114] ss:$9 sm:$0xff] %v1073
      %1138 = vst [vmem:[%s1117] ss:$9 sm:$0xff] %v1074
      %1140 = vst [vmem:[%s1120] ss:$9 sm:$0xff] %v1075
      %1142 = vst [vmem:[%s1123] ss:$9 sm:$0xff] %v1076
      %v1143 = vld [vmem:[#allocation1] sm:$0xff]
      %1146 = vst [vmem:[#allocation1] ss:$9 sm:$0xff] %v1077
      %1148 = vst [vmem:[%s1105] ss:$9 sm:$0xff] %v1078
      %1150 = vst [vmem:[%s1108] ss:$9 sm:$0xff] %v1079
      %1152 = vst [vmem:[%s1111] ss:$9 sm:$0xff] %v1080
      %1154 = vst [vmem:[%s1114] ss:$9 sm:$0xff] %v1081
      %1156 = vst [vmem:[%s1117] ss:$9 sm:$0xff] %v1082
      %1158 = vst [vmem:[%s1120] ss:$9 sm:$0xff] %v1083
      %1160 = vst [vmem:[%s1123] ss:$9 sm:$0xff] %v1084
      %v1161 = vld [vmem:[#allocation1] sm:$0xff]
      %1164 = vst [vmem:[#allocation1] ss:$9 sm:$0xff] %v1085
      %1166 = vst [vmem:[%s1105] ss:$9 sm:$0xff] %v1086
      %1168 = vst [vmem:[%s1108] ss:$9 sm:$0xff] %v1087
      %1170 = vst [vmem:[%s1111] ss:$9 sm:$0xff] %v1088
      %1172 = vst [vmem:[%s1114] ss:$9 sm:$0xff] %v1089
      %1174 = vst [vmem:[%s1117] ss:$9 sm:$0xff] %v1090
      %1176 = vst [vmem:[%s1120] ss:$9 sm:$0xff] %v1091
      %1178 = vst [vmem:[%s1123] ss:$9 sm:$0xff] %v1092
      %v1179 = vld [vmem:[#allocation1] sm:$0xff]
      %1182 = vst [vmem:[#allocation1] ss:$9 sm:$0xff] %v1093
      %1184 = vst [vmem:[%s1105] ss:$9 sm:$0xff] %v1094
      %1186 = vst [vmem:[%s1108] ss:$9 sm:$0xff] %v1095
      %1188 = vst [vmem:[%s1111] ss:$9 sm:$0xff] %v1096
      %1190 = vst [vmem:[%s1114] ss:$9 sm:$0xff] %v1097
      %1192 = vst [vmem:[%s1117] ss:$9 sm:$0xff] %v1098
      %1194 = vst [vmem:[%s1120] ss:$9 sm:$0xff] %v1099
      %1196 = vst [vmem:[%s1123] ss:$9 sm:$0xff] %v1100
      %v1197 = vld [vmem:[#allocation1] sm:$0xff]
      %1200 = vst [vmem:[#allocation1] ss:$9 sm:$0xff] %v761
      %v1201 = vld [vmem:[#allocation1] sm:$0xff]
      %1203 = vrot.lane.b32.xlu0 %v1125, 32
      %v1204 = vpop.permute.xlu0 %1203
      %1205 = vrot.lane.b32.xlu0 %v1143, 32
      %v1206 = vpop.permute.xlu0 %1205
      %1207 = vrot.lane.b32.xlu0 %v1161, 32
      %v1208 = vpop.permute.xlu0 %1207
      %1209 = vrot.lane.b32.xlu0 %v1179, 32
      %v1210 = vpop.permute.xlu0 %1209
      %1211 = vrot.lane.b32.xlu0 %v1197, 32
      %v1212 = vpop.permute.xlu0 %1211
      %1213 = vrot.lane.b32.xlu0 %v1201, 32
      %v1214 = vpop.permute.xlu0 %1213
      %v1215 = vpack.i.b16 %v683, %v682
      %v1216 = vpack.i.b16 %v685, %v684
      %v1217 = vpack.i.b16 %v687, %v686
      %v1218 = vpack.i.b16 %v689, %v688
      %v1219 = vpack.i.b16 %v691, %v762
      %v1220 = vpack.i.b16 %v693, %v692
      %v1221 = vpack.i.b16 %v695, %v694
      %v1222 = vpack.i.b16 %v697, %v696
      %v1223 = vpack.i.b16 %v763, %v698
      %v1224 = vpack.i.b16 %v701, %v700
      %v1225 = vpack.i.b16 %v703, %v702
      %v1226 = vpack.i.b16 %v705, %v704
      %v1227 = vpack.i.b16 %v707, %v706
      %v1228 = vpack.i.b16 %v709, %v764
      %v1229 = vpack.i.b16 %v711, %v710
      %v1230 = vpack.i.b16 %v713, %v712
      %v1231 = vpack.i.b16 %v715, %v714
      %v1232 = vpack.i.b16 %v765, %v716
      %v1233 = vpack.i.b16 %v719, %v718
      %v1234 = vpack.i.b16 %v721, %v720
      %v1235 = vpack.i.b16 %v723, %v722
      %v1236 = vpack.i.b16 %v725, %v724
      %v1237 = vpack.i.b16 %v727, %v766
      %v1238 = vpack.i.b16 %v729, %v728
      %v1239 = vpack.i.b16 %v731, %v730
      %v1240 = vpack.i.b16 %v733, %v732
      %v1241 = vpack.i.b16 %v767, %v734
      %v1242 = vpack.i.b16 %v737, %v736
      %v1243 = vpack.i.b16 %v739, %v738
      %v1244 = vpack.i.b16 %v741, %v740
      %v1245 = vpack.i.b16 %v743, %v742
      %v1246 = vpack.i.b16 %v745, %v768
      %v1247 = vpack.i.b16 %v747, %v746
      %v1248 = vpack.i.b16 %v749, %v748
      %v1249 = vpack.i.b16 %v751, %v750
      %v1250 = vpack.i.b16 %v769, %v752
      %v1251 = vpack.i.b16 %v755, %v754
      %v1252 = vpack.i.b16 %v757, %v756
      %v1253 = vpack.i.b16 %v759, %v758
      %v1254 = vpack.i.b16 %v761, %v760
      %1257 = vst [vmem:[#allocation1] ss:$9 sm:$0xff] %v1215
      %s1259 = scalar_lea.vmem [#allocation1], 1
      %1260 = vst [vmem:[%s1259] ss:$9 sm:$0xff] %v1216
      %s1262 = scalar_lea.vmem [#allocation1], 2
      %1263 = vst [vmem:[%s1262] ss:$9 sm:$0xff] %v1217
      %s1265 = scalar_lea.vmem [#allocation1], 3
      %1266 = vst [vmem:[%s1265] ss:$9 sm:$0xff] %v1218
      %s1268 = scalar_lea.vmem [#allocation1], 4
      %1269 = vst [vmem:[%s1268] ss:$9 sm:$0xff] %v1219
      %s1271 = scalar_lea.vmem [#allocation1], 5
      %1272 = vst [vmem:[%s1271] ss:$9 sm:$0xff] %v1220
      %s1274 = scalar_lea.vmem [#allocation1], 6
      %1275 = vst [vmem:[%s1274] ss:$9 sm:$0xff] %v1221
      %s1277 = scalar_lea.vmem [#allocation1], 7
      %1278 = vst [vmem:[%s1277] ss:$9 sm:$0xff] %v1222
      %v1279 = vld [vmem:[#allocation1] sm:$0xff]
      %1282 = vst [vmem:[#allocation1] ss:$9 sm:$0xff] %v1223
      %1284 = vst [vmem:[%s1259] ss:$9 sm:$0xff] %v1224
      %1286 = vst [vmem:[%s1262] ss:$9 sm:$0xff] %v1225
      %1288 = vst [vmem:[%s1265] ss:$9 sm:$0xff] %v1226
      %1290 = vst [vmem:[%s1268] ss:$9 sm:$0xff] %v1227
      %1292 = vst [vmem:[%s1271] ss:$9 sm:$0xff] %v1228
      %1294 = vst [vmem:[%s1274] ss:$9 sm:$0xff] %v1229
      %1296 = vst [vmem:[%s1277] ss:$9 sm:$0xff] %v1230
      %v1297 = vld [vmem:[#allocation1] sm:$0xff]
      %1300 = vst [vmem:[#allocation1] ss:$9 sm:$0xff] %v1231
      %1302 = vst [vmem:[%s1259] ss:$9 sm:$0xff] %v1232
      %1304 = vst [vmem:[%s1262] ss:$9 sm:$0xff] %v1233
      %1306 = vst [vmem:[%s1265] ss:$9 sm:$0xff] %v1234
      %1308 = vst [vmem:[%s1268] ss:$9 sm:$0xff] %v1235
      %1310 = vst [vmem:[%s1271] ss:$9 sm:$0xff] %v1236
      %1312 = vst [vmem:[%s1274] ss:$9 sm:$0xff] %v1237
      %1314 = vst [vmem:[%s1277] ss:$9 sm:$0xff] %v1238
      %v1315 = vld [vmem:[#allocation1] sm:$0xff]
      %1318 = vst [vmem:[#allocation1] ss:$9 sm:$0xff] %v1239
      %1320 = vst [vmem:[%s1259] ss:$9 sm:$0xff] %v1240
      %1322 = vst [vmem:[%s1262] ss:$9 sm:$0xff] %v1241
      %1324 = vst [vmem:[%s1265] ss:$9 sm:$0xff] %v1242
      %1326 = vst [vmem:[%s1268] ss:$9 sm:$0xff] %v1243
      %1328 = vst [vmem:[%s1271] ss:$9 sm:$0xff] %v1244
      %1330 = vst [vmem:[%s1274] ss:$9 sm:$0xff] %v1245
      %1332 = vst [vmem:[%s1277] ss:$9 sm:$0xff] %v1246
      %v1333 = vld [vmem:[#allocation1] sm:$0xff]
      %1336 = vst [vmem:[#allocation1] ss:$9 sm:$0xff] %v1247
      %1338 = vst [vmem:[%s1259] ss:$9 sm:$0xff] %v1248
      %1340 = vst [vmem:[%s1262] ss:$9 sm:$0xff] %v1249
      %1342 = vst [vmem:[%s1265] ss:$9 sm:$0xff] %v1250
      %1344 = vst [vmem:[%s1268] ss:$9 sm:$0xff] %v1251
      %1346 = vst [vmem:[%s1271] ss:$9 sm:$0xff] %v1252
      %1348 = vst [vmem:[%s1274] ss:$9 sm:$0xff] %v1253
      %1350 = vst [vmem:[%s1277] ss:$9 sm:$0xff] %v1254
      %v1351 = vld [vmem:[#allocation1] sm:$0xff]
      %1354 = vst [vmem:[#allocation1] ss:$9 sm:$0xff] %v770
      %v1355 = vld [vmem:[#allocation1] sm:$0xff]
      %1357 = vrot.lane.b32.xlu0 %v1279, 48
      %v1358 = vpop.permute.xlu0 %1357
      %1359 = vrot.lane.b32.xlu0 %v1297, 48
      %v1360 = vpop.permute.xlu0 %1359
      %1361 = vrot.lane.b32.xlu0 %v1315, 48
      %v1362 = vpop.permute.xlu0 %1361
      %1363 = vrot.lane.b32.xlu0 %v1333, 48
      %v1364 = vpop.permute.xlu0 %1363
      %1365 = vrot.lane.b32.xlu0 %v1351, 48
      %v1366 = vpop.permute.xlu0 %1365
      %1367 = vrot.lane.b32.xlu0 %v1355, 48
      %v1368 = vpop.permute.xlu0 %1367
      %vm1369 = vcmask 130048
      %v1371 = vsel %vm1369, %v835, %v1050
      %v1373 = vsel %vm1369, %v852, %v1052
      %v1375 = vsel %vm1369, %v869, %v1054
      %v1377 = vsel %vm1369, %v886, %v1056
      %v1379 = vsel %vm1369, %v903, %v1058
      %v1381 = vsel %vm1369, %v906, %v1060
      %vm1382 = vcmask 261120
      %v1384 = vsel %vm1382, %v1371, %v1204
      %v1386 = vsel %vm1382, %v1373, %v1206
      %v1388 = vsel %vm1382, %v1375, %v1208
      %v1390 = vsel %vm1382, %v1377, %v1210
      %v1392 = vsel %vm1382, %v1379, %v1212
      %v1394 = vsel %vm1382, %v1381, %v1214
      %vm1395 = vcmask 392192
      %v1397 = vsel %vm1395, %v1384, %v1358
      %v1399 = vsel %vm1395, %v1386, %v1360
      %v1401 = vsel %vm1395, %v1388, %v1362
      %v1403 = vsel %vm1395, %v1390, %v1364
      %v1405 = vsel %vm1395, %v1392, %v1366
      %v1407 = vsel %vm1395, %v1394, %v1368
      %v1408 = vld [vmem:[%s1] sm:$0xf]
      %v1409 = vld [vmem:[%s1 + $0x4] sm:$0xf]
      %v1410 = vld [vmem:[%s1 + $0x8] sm:$0xf]
      %v1411 = vld [vmem:[%s1 + $0xc] sm:$0xf]
      %v1412 = vld [vmem:[%s1 + $0x10] sm:$0xf]
      %v1413 = vld [vmem:[%s1 + $0x14] sm:$0xf]
      %v1414 = vld [vmem:[%s1 + $0x18] sm:$0xf]
      %v1415 = vld [vmem:[%s1 + $0x1c] sm:$0xf]
      %v1416 = vld [vmem:[%s2] sm:$0x1]
      %v1418 = vperm.slane %v1416, 0
      %v1428 = vunpack.c.l.b16 %v1408
      %v1429 = vunpack.c.l.b16 %v1409
      %v1430 = vunpack.c.l.b16 %v1410
      %v1431 = vunpack.c.l.b16 %v1411
      %v1432 = vunpack.c.l.b16 %v1412
      %v1433 = vunpack.c.l.b16 %v1413
      %v1434 = vunpack.c.l.b16 %v1414
      %v1435 = vunpack.c.l.b16 %v1415
      %v1436 = vpack.c.b16 %v1429, %v1428
      %v1437 = vpack.c.b16 %v1431, %v1430
      %v1438 = vpack.c.b16 %v1433, %v1432
      %v1439 = vpack.c.b16 %v1435, %v1434
      %vm1444 = vcmask 523264
      %v1445 = vsel %vm1444, %v1397, 0
      %v1447 = vsel %vm1444, %v1399, 0
      %v1449 = vsel %vm1444, %v1401, 0
      %v1451 = vsel %vm1444, %v1403, 0
      %v1453 = vsel %vm1444, %v1405, 0
      %v1455 = vsel %vm1444, %v1407, 0
      %1457 = vmatpush.bf16.msra.mxu0 0
      %1458 = vmatpush.bf16.msra.mxu0 0
      %1459 = vmatpush.bf16.msra.mxu0 0
      %1460 = vmatpush.bf16.msra.mxu0 0
      %1461 = vmatpush.bf16.msra.mxu0 %v1439
      %1462 = vmatpush.bf16.msra.mxu0 %v1438
      %1463 = vmatpush.bf16.msra.mxu0 %v1437
      %1464 = vmatpush.bf16.msra.mxu0 %v1436
      %1465 = vmatmul.bf16.gmra.mxu0 %v1445
      %v1466 = vpop.f32.mrf.mxu0
      %v1467 = vadd.f32 %v1418, %v1466
      %v1468 = vpop.f32.mrf.mxu0
      %v1469 = vadd.f32 %v1418, %v1468
      %1470 = vmatmul.bf16.gmra.mxu0 %v1447
      %v1471 = vpop.f32.mrf.mxu0
      %v1472 = vadd.f32 %v1418, %v1471
      %v1473 = vpop.f32.mrf.mxu0
      %v1474 = vadd.f32 %v1418, %v1473
      %1475 = vmatmul.bf16.gmra.mxu0 %v1449
      %v1476 = vpop.f32.mrf.mxu0
      %v1477 = vadd.f32 %v1418, %v1476
      %v1478 = vpop.f32.mrf.mxu0
      %v1479 = vadd.f32 %v1418, %v1478
      %1480 = vmatmul.bf16.gmra.mxu0 %v1451
      %v1481 = vpop.f32.mrf.mxu0
      %v1482 = vadd.f32 %v1418, %v1481
      %v1483 = vpop.f32.mrf.mxu0
      %v1484 = vadd.f32 %v1418, %v1483
      %1485 = vmatmul.bf16.gmra.mxu0 %v1453
      %v1486 = vpop.f32.mrf.mxu0
      %v1487 = vadd.f32 %v1418, %v1486
      %v1488 = vpop.f32.mrf.mxu0
      %v1489 = vadd.f32 %v1418, %v1488
      %1490 = vmatmul.bf16.gmra.mxu0 %v1455
      %v1491 = vpop.f32.mrf.mxu0
      %v1492 = vadd.f32 %v1418, %v1491
      %v1493 = vpop.f32.mrf.mxu0
      %1494 = vdwg.mxu0
      %vm1495 = vcmp.ge.f32.partialorder %v1467, 0.0
      %vm1496 = vcmp.ge.f32.partialorder %v1469, 0.0
      %vm1497 = vcmp.ge.f32.partialorder %v1472, 0.0
      %vm1498 = vcmp.ge.f32.partialorder %v1474, 0.0
      %vm1499 = vcmp.ge.f32.partialorder %v1477, 0.0
      %vm1500 = vcmp.ge.f32.partialorder %v1479, 0.0
      %vm1501 = vcmp.ge.f32.partialorder %v1482, 0.0
      %vm1502 = vcmp.ge.f32.partialorder %v1484, 0.0
      %vm1503 = vcmp.ge.f32.partialorder %v1487, 0.0
      %vm1504 = vcmp.ge.f32.partialorder %v1489, 0.0
      %vm1505 = vcmp.ge.f32.partialorder %v1492, 0.0
      %v1506 = vmul.f32 %v1467, 0.2
      %v1507 = vmul.f32 %v1469, 0.2
      %v1508 = vmul.f32 %v1472, 0.2
      %v1509 = vmul.f32 %v1474, 0.2
      %v1510 = vmul.f32 %v1477, 0.2
      %v1511 = vmul.f32 %v1479, 0.2
      %v1512 = vmul.f32 %v1482, 0.2
      %v1513 = vmul.f32 %v1484, 0.2
      %v1514 = vmul.f32 %v1487, 0.2
      %v1515 = vmul.f32 %v1489, 0.2
      %v1516 = vmul.f32 %v1492, 0.2
      %v1517 = vsel %vm1495, %v1467, %v1506
      %v1518 = vsel %vm1496, %v1469, %v1507
      %v1519 = vsel %vm1497, %v1472, %v1508
      %v1520 = vsel %vm1498, %v1474, %v1509
      %v1521 = vsel %vm1499, %v1477, %v1510
      %v1522 = vsel %vm1500, %v1479, %v1511
      %v1523 = vsel %vm1501, %v1482, %v1512
      %v1524 = vsel %vm1502, %v1484, %v1513
      %v1525 = vsel %vm1503, %v1487, %v1514
      %v1526 = vsel %vm1504, %v1489, %v1515
      %v1527 = vsel %vm1505, %v1492, %v1516
      %v1539 = vrot.slane %v1517, 1
      %v1540 = vrot.slane %v1517, 2
      %v1541 = vrot.slane %v1517, 3
      %v1542 = vrot.slane %v1517, 4
      %v1543 = vrot.slane %v1517, 5
      %v1544 = vrot.slane %v1517, 6
      %v1545 = vrot.slane %v1517, 7
      %v1546 = vrot.slane %v1518, 1
      %v1547 = vrot.slane %v1518, 2
      %v1548 = vrot.slane %v1518, 3
      %v1549 = vrot.slane %v1518, 4
      %v1550 = vrot.slane %v1518, 5
      %v1551 = vrot.slane %v1518, 6
      %v1552 = vrot.slane %v1518, 7
      %v1553 = vrot.slane %v1519, 1
      %v1554 = vrot.slane %v1519, 2
      %v1555 = vrot.slane %v1519, 3
      %v1556 = vrot.slane %v1519, 4
      %v1557 = vrot.slane %v1519, 5
      %v1558 = vrot.slane %v1519, 6
      %v1559 = vrot.slane %v1519, 7
      %v1560 = vrot.slane %v1520, 1
      %v1561 = vrot.slane %v1520, 2
      %v1562 = vrot.slane %v1520, 3
      %v1563 = vrot.slane %v1520, 4
      %v1564 = vrot.slane %v1520, 5
      %v1565 = vrot.slane %v1520, 6
      %v1566 = vrot.slane %v1520, 7
      %v1567 = vrot.slane %v1521, 1
      %v1568 = vrot.slane %v1521, 2
      %v1569 = vrot.slane %v1521, 3
      %v1570 = vrot.slane %v1521, 4
      %v1571 = vrot.slane %v1521, 5
      %v1572 = vrot.slane %v1521, 6
      %v1573 = vrot.slane %v1521, 7
      %v1574 = vrot.slane %v1522, 1
      %v1575 = vrot.slane %v1522, 2
      %v1576 = vrot.slane %v1522, 3
      %v1577 = vrot.slane %v1522, 4
      %v1578 = vrot.slane %v1522, 5
      %v1579 = vrot.slane %v1522, 6
      %v1580 = vrot.slane %v1522, 7
      %v1581 = vrot.slane %v1523, 1
      %v1582 = vrot.slane %v1523, 2
      %v1583 = vrot.slane %v1523, 3
      %v1584 = vrot.slane %v1523, 4
      %v1585 = vrot.slane %v1523, 5
      %v1586 = vrot.slane %v1523, 6
      %v1587 = vrot.slane %v1523, 7
      %v1588 = vrot.slane %v1524, 1
      %v1589 = vrot.slane %v1524, 2
      %v1590 = vrot.slane %v1524, 3
      %v1591 = vrot.slane %v1524, 4
      %v1592 = vrot.slane %v1524, 5
      %v1593 = vrot.slane %v1524, 6
      %v1594 = vrot.slane %v1524, 7
      %v1595 = vrot.slane %v1525, 1
      %v1596 = vrot.slane %v1525, 2
      %v1597 = vrot.slane %v1525, 3
      %v1598 = vrot.slane %v1525, 4
      %v1599 = vrot.slane %v1525, 5
      %v1600 = vrot.slane %v1525, 6
      %v1601 = vrot.slane %v1525, 7
      %v1602 = vrot.slane %v1526, 1
      %v1603 = vrot.slane %v1526, 2
      %v1604 = vrot.slane %v1526, 3
      %v1605 = vrot.slane %v1526, 4
      %v1606 = vrot.slane %v1526, 5
      %v1607 = vrot.slane %v1526, 6
      %v1608 = vrot.slane %v1526, 7
      %1609 = vst [vmem:[#allocation1] ss:$9 sm:$0xff] %v1517
      %s1610 = scalar_lea.vmem [#allocation1], 1
      %1611 = vst [vmem:[%s1610] ss:$9 sm:$0xff] %v1539
      %s1612 = scalar_lea.vmem [#allocation1], 2
      %1613 = vst [vmem:[%s1612] ss:$9 sm:$0xff] %v1540
      %s1614 = scalar_lea.vmem [#allocation1], 3
      %1615 = vst [vmem:[%s1614] ss:$9 sm:$0xff] %v1541
      %s1616 = scalar_lea.vmem [#allocation1], 4
      %1617 = vst [vmem:[%s1616] ss:$9 sm:$0xff] %v1542
      %s1618 = scalar_lea.vmem [#allocation1], 5
      %1619 = vst [vmem:[%s1618] ss:$9 sm:$0xff] %v1543
      %s1620 = scalar_lea.vmem [#allocation1], 6
      %1621 = vst [vmem:[%s1620] ss:$9 sm:$0xff] %v1544
      %s1622 = scalar_lea.vmem [#allocation1], 7
      %1623 = vst [vmem:[%s1622] ss:$9 sm:$0xff] %v1545
      %v1624 = vld [vmem:[#allocation1] sm:$0xff]
      %1625 = vst [vmem:[#allocation1] ss:$9 sm:$0xff] %v1518
      %v1626 = vld [vmem:[#allocation1] sm:$0xff]
      %1627 = vst [vmem:[#allocation1] ss:$9 sm:$0xff] %v1546
      %1628 = vst [vmem:[%s1610] ss:$9 sm:$0xff] %v1547
      %1629 = vst [vmem:[%s1612] ss:$9 sm:$0xff] %v1548
      %1630 = vst [vmem:[%s1614] ss:$9 sm:$0xff] %v1549
      %1631 = vst [vmem:[%s1616] ss:$9 sm:$0xff] %v1550
      %1632 = vst [vmem:[%s1618] ss:$9 sm:$0xff] %v1551
      %1633 = vst [vmem:[%s1620] ss:$9 sm:$0xff] %v1552
      %1634 = vst [vmem:[%s1622] ss:$9 sm:$0xff] %v1519
      %v1635 = vld [vmem:[#allocation1] sm:$0xff]
      %1636 = vst [vmem:[#allocation1] ss:$9 sm:$0xff] %v1553
      %v1637 = vld [vmem:[#allocation1] sm:$0xff]
      %1638 = vst [vmem:[#allocation1] ss:$9 sm:$0xff] %v1554
      %1639 = vst [vmem:[%s1610] ss:$9 sm:$0xff] %v1555
      %1640 = vst [vmem:[%s1612] ss:$9 sm:$0xff] %v1556
      %1641 = vst [vmem:[%s1614] ss:$9 sm:$0xff] %v1557
      %1642 = vst [vmem:[%s1616] ss:$9 sm:$0xff] %v1558
      %1643 = vst [vmem:[%s1618] ss:$9 sm:$0xff] %v1559
      %1644 = vst [vmem:[%s1620] ss:$9 sm:$0xff] %v1520
      %1645 = vst [vmem:[%s1622] ss:$9 sm:$0xff] %v1560
      %v1646 = vld [vmem:[#allocation1] sm:$0xff]
      %1647 = vst [vmem:[#allocation1] ss:$9 sm:$0xff] %v1561
      %v1648 = vld [vmem:[#allocation1] sm:$0xff]
      %1649 = vst [vmem:[#allocation1] ss:$9 sm:$0xff] %v1562
      %1650 = vst [vmem:[%s1610] ss:$9 sm:$0xff] %v1563
      %1651 = vst [vmem:[%s1612] ss:$9 sm:$0xff] %v1564
      %1652 = vst [vmem:[%s1614] ss:$9 sm:$0xff] %v1565
      %1653 = vst [vmem:[%s1616] ss:$9 sm:$0xff] %v1566
      %1654 = vst [vmem:[%s1618] ss:$9 sm:$0xff] %v1521
      %1655 = vst [vmem:[%s1620] ss:$9 sm:$0xff] %v1567
      %1656 = vst [vmem:[%s1622] ss:$9 sm:$0xff] %v1568
      %v1657 = vld [vmem:[#allocation1] sm:$0xff]
      %1658 = vst [vmem:[#allocation1] ss:$9 sm:$0xff] %v1569
      %v1659 = vld [vmem:[#allocation1] sm:$0xff]
      %1660 = vst [vmem:[#allocation1] ss:$9 sm:$0xff] %v1570
      %1661 = vst [vmem:[%s1610] ss:$9 sm:$0xff] %v1571
      %1662 = vst [vmem:[%s1612] ss:$9 sm:$0xff] %v1572
      %1663 = vst [vmem:[%s1614] ss:$9 sm:$0xff] %v1573
      %1664 = vst [vmem:[%s1616] ss:$9 sm:$0xff] %v1522
      %1665 = vst [vmem:[%s1618] ss:$9 sm:$0xff] %v1574
      %1666 = vst [vmem:[%s1620] ss:$9 sm:$0xff] %v1575
      %1667 = vst [vmem:[%s1622] ss:$9 sm:$0xff] %v1576
      %v1668 = vld [vmem:[#allocation1] sm:$0xff]
      %1669 = vst [vmem:[#allocation1] ss:$9 sm:$0xff] %v1577
      %v1670 = vld [vmem:[#allocation1] sm:$0xff]
      %1671 = vst [vmem:[#allocation1] ss:$9 sm:$0xff] %v1578
      %1672 = vst [vmem:[%s1610] ss:$9 sm:$0xff] %v1579
      %1673 = vst [vmem:[%s1612] ss:$9 sm:$0xff] %v1580
      %1674 = vst [vmem:[%s1614] ss:$9 sm:$0xff] %v1523
      %1675 = vst [vmem:[%s1616] ss:$9 sm:$0xff] %v1581
      %1676 = vst [vmem:[%s1618] ss:$9 sm:$0xff] %v1582
      %1677 = vst [vmem:[%s1620] ss:$9 sm:$0xff] %v1583
      %1678 = vst [vmem:[%s1622] ss:$9 sm:$0xff] %v1584
      %v1679 = vld [vmem:[#allocation1] sm:$0xff]
      %1680 = vst [vmem:[#allocation1] ss:$9 sm:$0xff] %v1585
      %v1681 = vld [vmem:[#allocation1] sm:$0xff]
      %1682 = vst [vmem:[#allocation1] ss:$9 sm:$0xff] %v1586
      %1683 = vst [vmem:[%s1610] ss:$9 sm:$0xff] %v1587
      %1684 = vst [vmem:[%s1612] ss:$9 sm:$0xff] %v1524
      %1685 = vst [vmem:[%s1614] ss:$9 sm:$0xff] %v1588
      %1686 = vst [vmem:[%s1616] ss:$9 sm:$0xff] %v1589
      %1687 = vst [vmem:[%s1618] ss:$9 sm:$0xff] %v1590
      %1688 = vst [vmem:[%s1620] ss:$9 sm:$0xff] %v1591
      %1689 = vst [vmem:[%s1622] ss:$9 sm:$0xff] %v1592
      %v1690 = vld [vmem:[#allocation1] sm:$0xff]
      %1691 = vst [vmem:[#allocation1] ss:$9 sm:$0xff] %v1593
      %v1692 = vld [vmem:[#allocation1] sm:$0xff]
      %1693 = vst [vmem:[#allocation1] ss:$9 sm:$0xff] %v1594
      %1694 = vst [vmem:[%s1610] ss:$9 sm:$0xff] %v1525
      %1695 = vst [vmem:[%s1612] ss:$9 sm:$0xff] %v1595
      %1696 = vst [vmem:[%s1614] ss:$9 sm:$0xff] %v1596
      %1697 = vst [vmem:[%s1616] ss:$9 sm:$0xff] %v1597
      %1698 = vst [vmem:[%s1618] ss:$9 sm:$0xff] %v1598
      %1699 = vst [vmem:[%s1620] ss:$9 sm:$0xff] %v1599
      %1700 = vst [vmem:[%s1622] ss:$9 sm:$0xff] %v1600
      %v1701 = vld [vmem:[#allocation1] sm:$0xff]
      %1702 = vst [vmem:[#allocation1] ss:$9 sm:$0xff] %v1601
      %v1703 = vld [vmem:[#allocation1] sm:$0xff]
      %1704 = vst [vmem:[#allocation1] ss:$9 sm:$0xff] %v1526
      %1705 = vst [vmem:[%s1610] ss:$9 sm:$0xff] %v1602
      %1706 = vst [vmem:[%s1612] ss:$9 sm:$0xff] %v1603
      %1707 = vst [vmem:[%s1614] ss:$9 sm:$0xff] %v1604
      %1708 = vst [vmem:[%s1616] ss:$9 sm:$0xff] %v1605
      %1709 = vst [vmem:[%s1618] ss:$9 sm:$0xff] %v1606
      %1710 = vst [vmem:[%s1620] ss:$9 sm:$0xff] %v1607
      %1711 = vst [vmem:[%s1622] ss:$9 sm:$0xff] %v1608
      %v1712 = vld [vmem:[#allocation1] sm:$0xff]
      %1713 = vst [vmem:[#allocation1] ss:$9 sm:$0xff] %v1527
      %v1714 = vld [vmem:[#allocation1] sm:$0xff]
      %v1733 = vpack.c.bf16 %v1624, %v1624
      %v1734 = vpack.c.bf16 %v1626, %v1626
      %v1735 = vpack.c.bf16 %v1635, %v1635
      %v1736 = vpack.c.bf16 %v1637, %v1637
      %v1737 = vpack.c.bf16 %v1646, %v1646
      %v1738 = vpack.c.bf16 %v1648, %v1648
      %v1739 = vpack.c.bf16 %v1657, %v1657
      %v1740 = vpack.c.bf16 %v1659, %v1659
      %v1741 = vpack.c.bf16 %v1668, %v1668
      %v1742 = vpack.c.bf16 %v1670, %v1670
      %v1743 = vpack.c.bf16 %v1679, %v1679
      %v1744 = vpack.c.bf16 %v1681, %v1681
      %v1745 = vpack.c.bf16 %v1690, %v1690
      %v1746 = vpack.c.bf16 %v1692, %v1692
      %v1747 = vpack.c.bf16 %v1701, %v1701
      %v1748 = vpack.c.bf16 %v1703, %v1703
      %v1749 = vpack.c.bf16 %v1712, %v1712
      %v1750 = vpack.c.bf16 %v1714, %v1714
      %vm1751 = vcmask 519168
      %1752 = vst.msk [vmem:[%s170] sm:$0xf] %vm1751, %v1733
      %vm1753 = vcmask 516096
      %vm1754 = vsmask.f32 256
      %vm1755 = vmand %vm1753, %vm1754
      %v1756 = vld [vmem:[%s170 + $0x4] sm:$0x1]
      %v1757 = vsel %vm1755, %v1734, %v1756
      %1758 = vst [vmem:[%s170 + $0x4] sm:$0x1] %v1757
      %1759 = vst.msk [vmem:[%s170 + $0x8] sm:$0xf] %vm1751, %v1735
      %v1760 = vld [vmem:[%s170 + $0xc] sm:$0x1]
      %v1761 = vsel %vm1755, %v1736, %v1760
      %1762 = vst [vmem:[%s170 + $0xc] sm:$0x1] %v1761
      %1763 = vst.msk [vmem:[%s170 + $0x10] sm:$0xf] %vm1751, %v1737
      %v1764 = vld [vmem:[%s170 + $0x14] sm:$0x1]
      %v1765 = vsel %vm1755, %v1738, %v1764
      %1766 = vst [vmem:[%s170 + $0x14] sm:$0x1] %v1765
      %1767 = vst.msk [vmem:[%s170 + $0x18] sm:$0xf] %vm1751, %v1739
      %v1768 = vld [vmem:[%s170 + $0x1c] sm:$0x1]
      %v1769 = vsel %vm1755, %v1740, %v1768
      %1770 = vst [vmem:[%s170 + $0x1c] sm:$0x1] %v1769
      %1771 = vst.msk [vmem:[%s170 + $0x20] sm:$0xf] %vm1751, %v1741
      %v1772 = vld [vmem:[%s170 + $0x24] sm:$0x1]
      %v1773 = vsel %vm1755, %v1742, %v1772
      %1774 = vst [vmem:[%s170 + $0x24] sm:$0x1] %v1773
      %1775 = vst.msk [vmem:[%s170 + $0x28] sm:$0xf] %vm1751, %v1743
      %v1776 = vld [vmem:[%s170 + $0x2c] sm:$0x1]
      %v1777 = vsel %vm1755, %v1744, %v1776
      %1778 = vst [vmem:[%s170 + $0x2c] sm:$0x1] %v1777
      %1779 = vst.msk [vmem:[%s170 + $0x30] sm:$0xf] %vm1751, %v1745
      %v1780 = vld [vmem:[%s170 + $0x34] sm:$0x1]
      %v1781 = vsel %vm1755, %v1746, %v1780
      %1782 = vst [vmem:[%s170 + $0x34] sm:$0x1] %v1781
      %1783 = vst.msk [vmem:[%s170 + $0x38] sm:$0xf] %vm1751, %v1747
      %v1784 = vld [vmem:[%s170 + $0x3c] sm:$0x1]
      %v1785 = vsel %vm1755, %v1748, %v1784
      %1786 = vst [vmem:[%s170 + $0x3c] sm:$0x1] %v1785
      %1787 = vst.msk [vmem:[%s170 + $0x40] sm:$0xf] %vm1751, %v1749
      %v1788 = vld [vmem:[%s170 + $0x44] sm:$0x1]
      %v1789 = vsel %vm1755, %v1750, %v1788
      %1790 = vst [vmem:[%s170 + $0x44] sm:$0x1] %v1789
      %p1791 = scmp.lt.s32.totalorder %s14, 1
      %s1792 = scalar_select %p1791, %s14, 1
      %s1793 = smul.addr %s1792, 18
      %s1794 = smul.addr %s1793, 4
      %s1795 = scalar_lea.vmem %s3, %s1794
      // Predicated region
      $region33: #{tpu_custom_call.1} parent=31 // pred_check
        %p1796 = pneg %p100
      $region34: #{tpu_custom_call.1} parent=31 // pred_check_branch
        %1798 = sbr.rel (%p1796) target = $region36
      $region35: #{tpu_custom_call.1} parent=31 // pred_region
        _
      $region36: #{tpu_custom_call.1} parent=31 // pred_fallthru
        _
    $region32: #{tpu_custom_call.1} parent=5 // pred_fallthru
      _
    %p1799 = scmp.le.s32.totalorder 2, %s9
    // Predicated region
    $region37: #{tpu_custom_call.1} parent=5 // pred_check
      %p1800 = pneg %p1799
    $region38: #{tpu_custom_call.1} parent=5 // pred_check_branch
      %1802 = sbr.rel (%p1800) target = $region40
    $region39: #{tpu_custom_call.1} parent=5 // pred_region
      %s1803 = ssub.s32 %s9, 2
      // Predicated region
      $region41: #{tpu_custom_call.1} parent=39 // pred_check
        %p1804 = pneg %p106
      $region42: #{tpu_custom_call.1} parent=39 // pred_check_branch
        %1806 = sbr.rel (%p1804) target = $region44
      $region43: #{tpu_custom_call.1} parent=39 // pred_region
        %p1807 = scmp.lt.s32.totalorder %s15, 1
        %s1808 = scalar_select %p1807, %s15, 1
        %s1809 = smul.addr %s1808, 18
        %s1810 = smul.addr %s1809, 4
        %s1811 = scalar_lea.vmem %s3, %s1810
      $region44: #{tpu_custom_call.1} parent=39 // pred_fallthru
        _
    $region40: #{tpu_custom_call.1} parent=5 // pred_fallthru
      _
  $region6: #{tpu_custom_call.1} parent=0 // loop_footer
    %s13 = sadd.s32 1, %s9
  $region7: #{tpu_custom_call.1} parent=0 // loop_footer_branch
    %8 = sbr.rel target = $region3
  $region8: #{tpu_custom_call.1} parent=0 // loop_exit
    _

</llo_original>
